<compile_context>
chip_gen: v5e
topology: v5e:2x2
jax: 0.10.0
libtpu: 0.0.40
codegen_flags: <defaults>
</compile_context>

<pallas_src>
import jax
import jax.numpy as jnp
from jax.experimental import pallas as pl
from jax.experimental.pallas import tpu as pltpu

_LANE = 128
_VMEM_LIMIT_BYTES = 64 * 1024 * 1024  # <= physical VMEM on all generations


def _round_up(x, m):
    return ((x + m - 1) // m) * m


def _pick_tile(dim, candidates):
    for t in candidates:
        if dim % t == 0:
            return t
    return dim  # small / odd channel count: single full-extent block


# ---------------------------------------------------------------------------
# Pallas kernels
# ---------------------------------------------------------------------------

def _matmul_bn_relu_kernel(x_ref, w_ref, scale_ref, shift_ref, o_ref):
    # x_ref: (tm, Cin) bf16, w_ref: (Cin, Cout_p) bf16,
    # scale/shift: (1, Cout_p) f32, o_ref: (tm, Cout_p) f32
    acc = jnp.dot(x_ref[...], w_ref[...], preferred_element_type=jnp.float32)
    y = acc * scale_ref[...] + shift_ref[...]
    o_ref[...] = jnp.maximum(y, 0.0).astype(o_ref.dtype)


def _conv3x3_bn_relu_kernel(x_ref, w_ref, scale_ref, shift_ref, o_ref, acc_ref):
    # x_ref:       (1, H, W, CIN_T) bf16, spatially UNPADDED (halo built here as zeros)
    # w_ref:       (3, 3, CIN_T, COUT_T) bf16
    # scale/shift: (1, COUT_T) f32
    # o_ref:       (1, H, W, COUT_T) f32
    # acc_ref:     (H, W, COUT_T) f32 VMEM accumulator, lives across the Cin grid axis
    ci = pl.program_id(2)

    _, H, W, cin_t = x_ref.shape
    x = x_ref[0]                                        # (H, W, CIN_T)

    # 1-pixel zero halo built in VMEM (avoids an HBM round-trip of a padded copy).
    zr = jnp.zeros((1, W, cin_t), x.dtype)
    zc = jnp.zeros((H + 2, 1, cin_t), x.dtype)
    xp = jnp.concatenate([zr, x, zr], axis=0)           # (H+2, W,   CIN_T)
    xp = jnp.concatenate([zc, xp, zc], axis=1)          # (H+2, W+2, CIN_T)

    # One MXU contraction per tap ((H*W, CIN_T) x (CIN_T, COUT_T)), summed into a
    # local f32 value so the VMEM accumulator is touched only once per Cin step.
    partial = jnp.zeros(acc_ref.shape, jnp.float32)
    for ky in range(3):
        for kx in range(3):
            a = xp[ky:ky + H, kx:kx + W, :]             # (H, W, CIN_T), static slice
            partial = partial + jnp.einsum(
                'hwc,cd->hwd', a, w_ref[ky, kx],
                preferred_element_type=jnp.float32)

    @pl.when(ci == 0)
    def _init():
        acc_ref[...] = partial

    @pl.when(ci > 0)
    def _accumulate():
        acc_ref[...] += partial

    @pl.when(ci == pl.num_programs(2) - 1)
    def _finalize():
        y = acc_ref[...] * scale_ref[...] + shift_ref[...]     # f32 epilogue
        o_ref[0] = jnp.maximum(y, 0.0).astype(o_ref.dtype)


# ---------------------------------------------------------------------------
# Wrappers around pallas_call
# ---------------------------------------------------------------------------

def matmul_bn_relu(x2d, w, scale, shift, *, block_m=512):
    """relu((x @ w) * scale + shift), row-tiled, lane-padded Cout, bf16 MXU operands."""
    M, cin = x2d.shape
    cout = w.shape[1]
    cout_p = _round_up(cout, _LANE)
    if cout_p != cout:
        w = jnp.pad(w, ((0, 0), (0, cout_p - cout)))
        scale = jnp.pad(scale, (0, cout_p - cout))
        shift = jnp.pad(shift, (0, cout_p - cout))
    tm = min(block_m, _round_up(M, 8))
    m_p = _round_up(M, tm)
    if m_p != M:
        x2d = jnp.pad(x2d, ((0, m_p - M), (0, 0)))

    out = pl.pallas_call(
        _matmul_bn_relu_kernel,
        out_shape=jax.ShapeDtypeStruct((m_p, cout_p), jnp.float32),
        grid=(m_p // tm,),
        in_specs=[
            pl.BlockSpec((tm, cin), lambda i: (i, 0)),
            pl.BlockSpec((cin, cout_p), lambda i: (0, 0)),
            pl.BlockSpec((1, cout_p), lambda i: (0, 0)),
            pl.BlockSpec((1, cout_p), lambda i: (0, 0)),
        ],
        out_specs=pl.BlockSpec((tm, cout_p), lambda i: (i, 0)),
        compiler_params=pltpu.CompilerParams(
            dimension_semantics=("parallel",),
            vmem_limit_bytes=_VMEM_LIMIT_BYTES),
    )(x2d.astype(jnp.bfloat16), w.astype(jnp.bfloat16),
      scale.reshape(1, cout_p).astype(jnp.float32),
      shift.reshape(1, cout_p).astype(jnp.float32))
    return out[:M, :cout]


def conv3x3_bn_relu(x_nhwc, w, scale, shift):
    """3x3 conv (padding=1, no bias) + folded BN + ReLU.

    Tiled over (batch, Cout-tiles, Cin-tiles); Cin is the last ('arbitrary') reduction
    axis with a VMEM f32 accumulator. Cout is lane-padded to a multiple of 128.
    """
    N, H, W, cin = x_nhwc.shape
    cout = w.shape[-1]
    cout_p = _round_up(cout, _LANE)
    if cout_p != cout:
        w = jnp.pad(w, ((0, 0), (0, 0), (0, 0), (0, cout_p - cout)))
        scale = jnp.pad(scale, (0, cout_p - cout))
        shift = jnp.pad(shift, (0, cout_p - cout))
    cin_t = _pick_tile(cin, (512, 256, 128))
    cout_t = _pick_tile(cout_p, (256, 128))
    grid = (N, cout_p // cout_t, cin // cin_t)

    out = pl.pallas_call(
        _conv3x3_bn_relu_kernel,
        out_shape=jax.ShapeDtypeStruct((N, H, W, cout_p), jnp.float32),
        grid=grid,
        in_specs=[
            pl.BlockSpec((1, H, W, cin_t), lambda n, co, ci: (n, 0, 0, ci)),
            pl.BlockSpec((3, 3, cin_t, cout_t), lambda n, co, ci: (0, 0, ci, co)),
            pl.BlockSpec((1, cout_t), lambda n, co, ci: (0, co)),
            pl.BlockSpec((1, cout_t), lambda n, co, ci: (0, co)),
        ],
        out_specs=pl.BlockSpec((1, H, W, cout_t), lambda n, co, ci: (n, 0, 0, co)),
        scratch_shapes=[pltpu.VMEM((H, W, cout_t), jnp.float32)],
        compiler_params=pltpu.CompilerParams(
            dimension_semantics=("parallel", "parallel", "arbitrary"),
            vmem_limit_bytes=_VMEM_LIMIT_BYTES),
    )(x_nhwc.astype(jnp.bfloat16), w.astype(jnp.bfloat16),
      scale.reshape(1, cout_p).astype(jnp.float32),
      shift.reshape(1, cout_p).astype(jnp.float32))
    return out[..., :cout]


# ---------------------------------------------------------------------------
# Plain-JAX glue (matches PyTorch semantics)
# ---------------------------------------------------------------------------

def adaptive_avg_pool_nhwc(x, out_size):
    """nn.AdaptiveAvgPool2d semantics: bin i = [floor(i*L/out), ceil((i+1)*L/out))."""
    N, H, W, C = x.shape

    def bins(L, out):
        starts = [(i * L) // out for i in range(out)]
        ends = [-(-((i + 1) * L) // out) for i in range(out)]
        return starts, ends

    hs, he = bins(H, out_size)
    ws, we = bins(W, out_size)
    rows = []
    for i in range(out_size):
        cols = []
        for j in range(out_size):
            patch = x[:, hs[i]:he[i], ws[j]:we[j], :]
            cols.append(patch.mean(axis=(1, 2)))      # (N, C)
        rows.append(jnp.stack(cols, axis=1))          # (N, out, C)
    return jnp.stack(rows, axis=1)                    # (N, out, out, C)


def bilinear_resize_nhwc(x, out_h, out_w):
    """F.interpolate(mode='bilinear', align_corners=False) semantics."""
    N, H, W, C = x.shape

    def src_idx(out_size, in_size):
        scale = in_size / out_size
        d = jnp.arange(out_size, dtype=jnp.float32)
        s = jnp.maximum((d + 0.5) * scale - 0.5, 0.0)
        lo = jnp.minimum(jnp.floor(s).astype(jnp.int32), in_size - 1)
        hi = jnp.minimum(lo + 1, in_size - 1)
        frac = s - lo.astype(jnp.float32)
        return lo, hi, frac

    ylo, yhi, yf = src_idx(out_h, H)
    xlo, xhi, xf = src_idx(out_w, W)
    top = x[:, ylo, :, :]
    bot = x[:, yhi, :, :]
    row = top * (1.0 - yf)[None, :, None, None] + bot * yf[None, :, None, None]
    left = row[:, :, xlo, :]
    right = row[:, :, xhi, :]
    return left * (1.0 - xf)[None, None, :, None] + right * xf[None, None, :, None]


def fold_bn(gamma, beta, mean, var, eps=1e-5):
    scale = gamma / jnp.sqrt(var + eps)
    shift = beta - mean * scale
    return scale, shift


def init_psp_params(key, in_channels, bin_sizes):
    out_channels = in_channels // len(bin_sizes)
    params = {"stages": [], "bottleneck": None}
    for _ in bin_sizes:
        key, k1, k2, k3, k4, k5 = jax.random.split(key, 6)
        w = 0.1 * jax.random.normal(k1, (in_channels, out_channels), jnp.float32)
        gamma = 1.0 + 0.1 * jax.random.normal(k2, (out_channels,), jnp.float32)
        beta = 0.1 * jax.random.normal(k3, (out_channels,), jnp.float32)
        mean = 0.1 * jax.random.normal(k4, (out_channels,), jnp.float32)
        var = jnp.abs(jax.random.normal(k5, (out_channels,), jnp.float32)) + 0.5
        scale, shift = fold_bn(gamma, beta, mean, var)
        params["stages"].append((w, scale, shift))
    c_total = in_channels + out_channels * len(bin_sizes)
    key, k1, k2, k3, k4, k5 = jax.random.split(key, 6)
    wb = 0.1 * jax.random.normal(k1, (3, 3, c_total, out_channels), jnp.float32)
    gamma = 1.0 + 0.1 * jax.random.normal(k2, (out_channels,), jnp.float32)
    beta = 0.1 * jax.random.normal(k3, (out_channels,), jnp.float32)
    mean = 0.1 * jax.random.normal(k4, (out_channels,), jnp.float32)
    var = jnp.abs(jax.random.normal(k5, (out_channels,), jnp.float32)) + 0.5
    scale, shift = fold_bn(gamma, beta, mean, var)
    params["bottleneck"] = (wb, scale, shift)
    return params


def psp_forward(x_nchw, params, bin_sizes):
    """Forward of _PSPModule. Input/output are NCHW (PyTorch convention)."""
    x = jnp.transpose(x_nchw, (0, 2, 3, 1))          # -> NHWC
    N, H, W, cin = x.shape
    out_channels = params["stages"][0][0].shape[1]

    # Pyramid stages: adaptive pool (JAX) -> ONE fused Pallas matmul for all stages
    # (pooled rows stacked along M, stage weights concatenated along Cout) ->
    # bilinear upsample (JAX).
    rows = []
    for b in bin_sizes:
        pooled = adaptive_avg_pool_nhwc(x, b)          # (N, b, b, Cin)
        rows.append(pooled.reshape(N * b * b, cin))
    x_all = jnp.concatenate(rows, axis=0)              # (sum_b N*b*b, Cin)
    w_all = jnp.concatenate([w for (w, _, _) in params["stages"]], axis=1)
    sc_all = jnp.concatenate([s for (_, s, _) in params["stages"]], axis=0)
    sh_all = jnp.concatenate([t for (_, _, t) in params["stages"]], axis=0)
    y_all = matmul_bn_relu(x_all, w_all, sc_all, sh_all)   # (M_total, S*Cout) f32

    pyramids = [x]
    row_off = 0
    for s, b in enumerate(bin_sizes):
        m = N * b * b
        y = y_all[row_off:row_off + m,
                  s * out_channels:(s + 1) * out_channels].reshape(N, b, b, out_channels)
        row_off += m
        pyramids.append(bilinear_resize_nhwc(y, H, W))

    cat = jnp.concatenate(pyramids, axis=-1)           # (N, H, W, Cin + S*Cout)
    wb, scale_b, shift_b = params["bottleneck"]
    out = conv3x3_bn_relu(cat, wb, scale_b, shift_b)   # Pallas tiled conv kernel
    return jnp.transpose(out, (0, 3, 1, 2))            # -> NCHW


if __name__ == "__main__":
    key = jax.random.PRNGKey(0)
    in_channels = 16
    bin_sizes = (1, 2, 3, 6)
    N, H, W = 2, 16, 16

    k_x, k_p = jax.random.split(key)
    x = jax.random.normal(k_x, (N, in_channels, H, W), jnp.float32)  # NCHW input
    params = init_psp_params(k_p, in_channels, bin_sizes)

    fwd = jax.jit(lambda inp: psp_forward(inp, params, bin_sizes))
    out = fwd(x)
    jax.block_until_ready(out)
    assert out.shape == (N, in_channels // len(bin_sizes), H, W)
    print("KERNEL_OK")
</pallas_src>

<mosaic_0001>
module attributes {stable_mosaic.version = 11 : i64} {
  func.func @_matmul_bn_relu_kernel(%arg0: i32, %arg1: memref<104x16xbf16, #tpu.memory_space<vmem>>, %arg2: memref<16x128xbf16, #tpu.memory_space<vmem>>, %arg3: memref<1x128xf32, #tpu.memory_space<vmem>>, %arg4: memref<1x128xf32, #tpu.memory_space<vmem>>, %arg5: memref<104x128xf32, #tpu.memory_space<vmem>>) attributes {dimension_semantics = [#tpu.dimension_semantics<parallel>], iteration_bounds = array<i64: 1>, scalar_prefetch = 0 : i64, scratch_operands = 0 : i64, tpu.core_type = #tpu.core_type<tc>, window_params = [{transform_indices = @transform_0, window_bounds = array<i64: 104, 16>}, {pipeline_mode = #tpu.pipeline_mode<synchronous>, transform_indices = @transform_1, window_bounds = array<i64: 16, 128>}, {pipeline_mode = #tpu.pipeline_mode<synchronous>, transform_indices = @transform_2, window_bounds = array<i64: 1, 128>}, {pipeline_mode = #tpu.pipeline_mode<synchronous>, transform_indices = @transform_3, window_bounds = array<i64: 1, 128>}, {transform_indices = @transform_4, window_bounds = array<i64: 104, 128>}]} {
    %c0 = arith.constant 0 : index
    %c0_0 = arith.constant 0 : index
    %0 = vector.load %arg1[%c0, %c0_0] : memref<104x16xbf16, #tpu.memory_space<vmem>>, vector<104x16xbf16>
    %c0_1 = arith.constant 0 : index
    %c0_2 = arith.constant 0 : index
    %1 = vector.load %arg2[%c0_1, %c0_2] : memref<16x128xbf16, #tpu.memory_space<vmem>>, vector<16x128xbf16>
    %cst = arith.constant dense<0.000000e+00> : vector<104x128xf32>
    %2 = tpu.matmul %0, %1, %cst {dimension_numbers = #tpu.dot_dimension_numbers<[1], [0], [0], [1], [0, 0, 1, 1], [], []>} : vector<104x16xbf16>, vector<16x128xbf16>, vector<104x128xf32> -> vector<104x128xf32>
    %c0_3 = arith.constant 0 : index
    %c0_4 = arith.constant 0 : index
    %3 = vector.load %arg3[%c0_3, %c0_4] : memref<1x128xf32, #tpu.memory_space<vmem>>, vector<1x128xf32>
    %4 = vector.broadcast %3 : vector<1x128xf32> to vector<104x128xf32>
    %5 = arith.mulf %2, %4 : vector<104x128xf32>
    %c0_5 = arith.constant 0 : index
    %c0_6 = arith.constant 0 : index
    %6 = vector.load %arg4[%c0_5, %c0_6] : memref<1x128xf32, #tpu.memory_space<vmem>>, vector<1x128xf32>
    %7 = vector.broadcast %6 : vector<1x128xf32> to vector<104x128xf32>
    %8 = arith.addf %5, %7 : vector<104x128xf32>
    %cst_7 = arith.constant 0.000000e+00 : f32
    %9 = vector.broadcast %cst_7 : f32 to vector<104x128xf32>
    %10 = arith.maximumf %8, %9 : vector<104x128xf32>
    %c0_8 = arith.constant 0 : index
    %c0_9 = arith.constant 0 : index
    %11 = vector.load %arg5[%c0_8, %c0_9] : memref<104x128xf32, #tpu.memory_space<vmem>>, vector<104x128xf32>
    tpu.vector_store %arg5[%c0_8, %c0_9], %10 {strides = array<i32>} : memref<104x128xf32, #tpu.memory_space<vmem>>, vector<104x128xf32>,
    return
  }
  func.func @transform_0(%arg0: i32) -> (i32, i32) {
    %c0_i32 = arith.constant 0 : i32
    %c0_i32_0 = arith.constant 0 : i32
    return %arg0, %c0_i32 : i32, i32
  }
  func.func @transform_1(%arg0: i32) -> (i32, i32) {
    %c0_i32 = arith.constant 0 : i32
    %c0_i32_0 = arith.constant 0 : i32
    %c0_i32_1 = arith.constant 0 : i32
    return %c0_i32, %c0_i32_0 : i32, i32
  }
  func.func @transform_2(%arg0: i32) -> (i32, i32) {
    %c0_i32 = arith.constant 0 : i32
    %c0_i32_0 = arith.constant 0 : i32
    %c0_i32_1 = arith.constant 0 : i32
    return %c0_i32, %c0_i32_0 : i32, i32
  }
  func.func @transform_3(%arg0: i32) -> (i32, i32) {
    %c0_i32 = arith.constant 0 : i32
    %c0_i32_0 = arith.constant 0 : i32
    %c0_i32_1 = arith.constant 0 : i32
    return %c0_i32, %c0_i32_0 : i32, i32
  }
  func.func @transform_4(%arg0: i32) -> (i32, i32) {
    %c0_i32 = arith.constant 0 : i32
    %c0_i32_0 = arith.constant 0 : i32
    return %arg0, %c0_i32 : i32, i32
  }
}

module attributes {stable_mosaic.version = 11 : i64} {
  func.func @_conv3x3_bn_relu_kernel(%arg0: i32, %arg1: i32, %arg2: i32, %arg3: memref<1x16x16x32xbf16, #tpu.memory_space<vmem>>, %arg4: memref<3x3x32x128xbf16, #tpu.memory_space<vmem>>, %arg5: memref<1x128xf32, #tpu.memory_space<vmem>>, %arg6: memref<1x128xf32, #tpu.memory_space<vmem>>, %arg7: memref<1x16x16x128xf32, #tpu.memory_space<vmem>>, %arg8: memref<16x16x128xf32, #tpu.memory_space<vmem>>) attributes {dimension_semantics = [#tpu.dimension_semantics<parallel>, #tpu.dimension_semantics<parallel>, #tpu.dimension_semantics<arbitrary>], iteration_bounds = array<i64: 2, 1, 1>, scalar_prefetch = 0 : i64, scratch_operands = 1 : i64, tpu.core_type = #tpu.core_type<tc>, window_params = [{transform_indices = @transform_0, window_bounds = array<i64: 1, 16, 16, 32>}, {transform_indices = @transform_1, window_bounds = array<i64: 3, 3, 32, 128>}, {transform_indices = @transform_2, window_bounds = array<i64: 1, 128>}, {transform_indices = @transform_3, window_bounds = array<i64: 1, 128>}, {transform_indices = @transform_4, window_bounds = array<i64: 1, 16, 16, 128>}]} {
    %c0 = arith.constant 0 : index
    %c0_0 = arith.constant 0 : index
    %c0_1 = arith.constant 0 : index
    %c0_2 = arith.constant 0 : index
    %0 = vector.load %arg3[%c0, %c0_0, %c0_1, %c0_2] : memref<1x16x16x32xbf16, #tpu.memory_space<vmem>>, vector<1x16x16x32xbf16>
    %1 = vector.shape_cast %0 : vector<1x16x16x32xbf16> to vector<16x16x32xbf16>
    %cst = arith.constant 0.000000e+00 : bf16
    %2 = vector.broadcast %cst : bf16 to vector<1x16x32xbf16>
    %cst_3 = arith.constant 0.000000e+00 : bf16
    %3 = vector.broadcast %cst_3 : bf16 to vector<18x1x32xbf16>
    %4 = tpu.concatenate %2, %1, %2 in 0 : vector<1x16x32xbf16>, vector<16x16x32xbf16>, vector<1x16x32xbf16> -> vector<18x16x32xbf16>
    %5 = tpu.concatenate %3, %4, %3 in 1 : vector<18x1x32xbf16>, vector<18x16x32xbf16>, vector<18x1x32xbf16> -> vector<18x18x32xbf16>
    %cst_4 = arith.constant 0.000000e+00 : f32
    %6 = vector.broadcast %cst_4 : f32 to vector<16x16x128xf32>
    %7 = vector.extract_strided_slice %5 {offsets = [0, 0, 0], sizes = [16, 16, 32], strides = [1, 1, 1]} : vector<18x18x32xbf16> to vector<16x16x32xbf16>
    %c0_5 = arith.constant 0 : index
    %c0_6 = arith.constant 0 : index
    %c0_7 = arith.constant 0 : index
    %c0_8 = arith.constant 0 : index
    %8 = vector.load %arg4[%c0_5, %c0_6, %c0_7, %c0_8] : memref<3x3x32x128xbf16, #tpu.memory_space<vmem>>, vector<1x1x32x128xbf16>
    %9 = vector.shape_cast %8 : vector<1x1x32x128xbf16> to vector<32x128xbf16>
    "tpu.trace_start"() <{level = 10 : i32, message = "hwc,cd->hwd"}> : () -> ()
    %cst_9 = arith.constant dense<0.000000e+00> : vector<16x16x128xf32>
    %10 = tpu.matmul %7, %9, %cst_9 {dimension_numbers = #tpu.dot_dimension_numbers<[2], [0], [0, 1], [1], [0, 0, 0, 1, 1, 1], [], []>} : vector<16x16x32xbf16>, vector<32x128xbf16>, vector<16x16x128xf32> -> vector<16x16x128xf32>
    "tpu.trace_stop"() : () -> ()
    %11 = arith.addf %6, %10 : vector<16x16x128xf32>
    %12 = vector.extract_strided_slice %5 {offsets = [0, 1, 0], sizes = [16, 16, 32], strides = [1, 1, 1]} : vector<18x18x32xbf16> to vector<16x16x32xbf16>
    %c0_10 = arith.constant 0 : index
    %c1 = arith.constant 1 : index
    %c0_11 = arith.constant 0 : index
    %c0_12 = arith.constant 0 : index
    %13 = vector.load %arg4[%c0_10, %c1, %c0_11, %c0_12] : memref<3x3x32x128xbf16, #tpu.memory_space<vmem>>, vector<1x1x32x128xbf16>
    %14 = vector.shape_cast %13 : vector<1x1x32x128xbf16> to vector<32x128xbf16>
    "tpu.trace_start"() <{level = 10 : i32, message = "hwc,cd->hwd"}> : () -> ()
    %cst_13 = arith.constant dense<0.000000e+00> : vector<16x16x128xf32>
    %15 = tpu.matmul %12, %14, %cst_13 {dimension_numbers = #tpu.dot_dimension_numbers<[2], [0], [0, 1], [1], [0, 0, 0, 1, 1, 1], [], []>} : vector<16x16x32xbf16>, vector<32x128xbf16>, vector<16x16x128xf32> -> vector<16x16x128xf32>
    "tpu.trace_stop"() : () -> ()
    %16 = arith.addf %11, %15 : vector<16x16x128xf32>
    %17 = vector.extract_strided_slice %5 {offsets = [0, 2, 0], sizes = [16, 16, 32], strides = [1, 1, 1]} : vector<18x18x32xbf16> to vector<16x16x32xbf16>
    %c0_14 = arith.constant 0 : index
    %c2 = arith.constant 2 : index
    %c0_15 = arith.constant 0 : index
    %c0_16 = arith.constant 0 : index
    %18 = vector.load %arg4[%c0_14, %c2, %c0_15, %c0_16] : memref<3x3x32x128xbf16, #tpu.memory_space<vmem>>, vector<1x1x32x128xbf16>
    %19 = vector.shape_cast %18 : vector<1x1x32x128xbf16> to vector<32x128xbf16>
    "tpu.trace_start"() <{level = 10 : i32, message = "hwc,cd->hwd"}> : () -> ()
    %cst_17 = arith.constant dense<0.000000e+00> : vector<16x16x128xf32>
    %20 = tpu.matmul %17, %19, %cst_17 {dimension_numbers = #tpu.dot_dimension_numbers<[2], [0], [0, 1], [1], [0, 0, 0, 1, 1, 1], [], []>} : vector<16x16x32xbf16>, vector<32x128xbf16>, vector<16x16x128xf32> -> vector<16x16x128xf32>
    "tpu.trace_stop"() : () -> ()
    %21 = arith.addf %16, %20 : vector<16x16x128xf32>
    %22 = vector.extract_strided_slice %5 {offsets = [1, 0, 0], sizes = [16, 16, 32], strides = [1, 1, 1]} : vector<18x18x32xbf16> to vector<16x16x32xbf16>
    %c1_18 = arith.constant 1 : index
    %c0_19 = arith.constant 0 : index
    %c0_20 = arith.constant 0 : index
    %c0_21 = arith.constant 0 : index
    %23 = vector.load %arg4[%c1_18, %c0_19, %c0_20, %c0_21] : memref<3x3x32x128xbf16, #tpu.memory_space<vmem>>, vector<1x1x32x128xbf16>
    %24 = vector.shape_cast %23 : vector<1x1x32x128xbf16> to vector<32x128xbf16>
    "tpu.trace_start"() <{level = 10 : i32, message = "hwc,cd->hwd"}> : () -> ()
    %cst_22 = arith.constant dense<0.000000e+00> : vector<16x16x128xf32>
    %25 = tpu.matmul %22, %24, %cst_22 {dimension_numbers = #tpu.dot_dimension_numbers<[2], [0], [0, 1], [1], [0, 0, 0, 1, 1, 1], [], []>} : vector<16x16x32xbf16>, vector<32x128xbf16>, vector<16x16x128xf32> -> vector<16x16x128xf32>
    "tpu.trace_stop"() : () -> ()
    %26 = arith.addf %21, %25 : vector<16x16x128xf32>
    %27 = vector.extract_strided_slice %5 {offsets = [1, 1, 0], sizes = [16, 16, 32], strides = [1, 1, 1]} : vector<18x18x32xbf16> to vector<16x16x32xbf16>
    %c1_23 = arith.constant 1 : index
    %c1_24 = arith.constant 1 : index
    %c0_25 = arith.constant 0 : index
    %c0_26 = arith.constant 0 : index
    %28 = vector.load %arg4[%c1_23, %c1_24, %c0_25, %c0_26] : memref<3x3x32x128xbf16, #tpu.memory_space<vmem>>, vector<1x1x32x128xbf16>
    %29 = vector.shape_cast %28 : vector<1x1x32x128xbf16> to vector<32x128xbf16>
    "tpu.trace_start"() <{level = 10 : i32, message = "hwc,cd->hwd"}> : () -> ()
    %cst_27 = arith.constant dense<0.000000e+00> : vector<16x16x128xf32>
    %30 = tpu.matmul %27, %29, %cst_27 {dimension_numbers = #tpu.dot_dimension_numbers<[2], [0], [0, 1], [1], [0, 0, 0, 1, 1, 1], [], []>} : vector<16x16x32xbf16>, vector<32x128xbf16>, vector<16x16x128xf32> -> vector<16x16x128xf32>
    "tpu.trace_stop"() : () -> ()
    %31 = arith.addf %26, %30 : vector<16x16x128xf32>
    %32 = vector.extract_strided_slice %5 {offsets = [1, 2, 0], sizes = [16, 16, 32], strides = [1, 1, 1]} : vector<18x18x32xbf16> to vector<16x16x32xbf16>
    %c1_28 = arith.constant 1 : index
    %c2_29 = arith.constant 2 : index
    %c0_30 = arith.constant 0 : index
    %c0_31 = arith.constant 0 : index
    %33 = vector.load %arg4[%c1_28, %c2_29, %c0_30, %c0_31] : memref<3x3x32x128xbf16, #tpu.memory_space<vmem>>, vector<1x1x32x128xbf16>
    %34 = vector.shape_cast %33 : vector<1x1x32x128xbf16> to vector<32x128xbf16>
    "tpu.trace_start"() <{level = 10 : i32, message = "hwc,cd->hwd"}> : () -> ()
    %cst_32 = arith.constant dense<0.000000e+00> : vector<16x16x128xf32>
    %35 = tpu.matmul %32, %34, %cst_32 {dimension_numbers = #tpu.dot_dimension_numbers<[2], [0], [0, 1], [1], [0, 0, 0, 1, 1, 1], [], []>} : vector<16x16x32xbf16>, vector<32x128xbf16>, vector<16x16x128xf32> -> vector<16x16x128xf32>
    "tpu.trace_stop"() : () -> ()
    %36 = arith.addf %31, %35 : vector<16x16x128xf32>
    %37 = vector.extract_strided_slice %5 {offsets = [2, 0, 0], sizes = [16, 16, 32], strides = [1, 1, 1]} : vector<18x18x32xbf16> to vector<16x16x32xbf16>
    %c2_33 = arith.constant 2 : index
    %c0_34 = arith.constant 0 : index
    %c0_35 = arith.constant 0 : index
    %c0_36 = arith.constant 0 : index
    %38 = vector.load %arg4[%c2_33, %c0_34, %c0_35, %c0_36] : memref<3x3x32x128xbf16, #tpu.memory_space<vmem>>, vector<1x1x32x128xbf16>
    %39 = vector.shape_cast %38 : vector<1x1x32x128xbf16> to vector<32x128xbf16>
    "tpu.trace_start"() <{level = 10 : i32, message = "hwc,cd->hwd"}> : () -> ()
    %cst_37 = arith.constant dense<0.000000e+00> : vector<16x16x128xf32>
    %40 = tpu.matmul %37, %39, %cst_37 {dimension_numbers = #tpu.dot_dimension_numbers<[2], [0], [0, 1], [1], [0, 0, 0, 1, 1, 1], [], []>} : vector<16x16x32xbf16>, vector<32x128xbf16>, vector<16x16x128xf32> -> vector<16x16x128xf32>
    "tpu.trace_stop"() : () -> ()
    %41 = arith.addf %36, %40 : vector<16x16x128xf32>
    %42 = vector.extract_strided_slice %5 {offsets = [2, 1, 0], sizes = [16, 16, 32], strides = [1, 1, 1]} : vector<18x18x32xbf16> to vector<16x16x32xbf16>
    %c2_38 = arith.constant 2 : index
    %c1_39 = arith.constant 1 : index
    %c0_40 = arith.constant 0 : index
    %c0_41 = arith.constant 0 : index
    %43 = vector.load %arg4[%c2_38, %c1_39, %c0_40, %c0_41] : memref<3x3x32x128xbf16, #tpu.memory_space<vmem>>, vector<1x1x32x128xbf16>
    %44 = vector.shape_cast %43 : vector<1x1x32x128xbf16> to vector<32x128xbf16>
    "tpu.trace_start"() <{level = 10 : i32, message = "hwc,cd->hwd"}> : () -> ()
    %cst_42 = arith.constant dense<0.000000e+00> : vector<16x16x128xf32>
    %45 = tpu.matmul %42, %44, %cst_42 {dimension_numbers = #tpu.dot_dimension_numbers<[2], [0], [0, 1], [1], [0, 0, 0, 1, 1, 1], [], []>} : vector<16x16x32xbf16>, vector<32x128xbf16>, vector<16x16x128xf32> -> vector<16x16x128xf32>
    "tpu.trace_stop"() : () -> ()
    %46 = arith.addf %41, %45 : vector<16x16x128xf32>
    %47 = vector.extract_strided_slice %5 {offsets = [2, 2, 0], sizes = [16, 16, 32], strides = [1, 1, 1]} : vector<18x18x32xbf16> to vector<16x16x32xbf16>
    %c2_43 = arith.constant 2 : index
    %c2_44 = arith.constant 2 : index
    %c0_45 = arith.constant 0 : index
    %c0_46 = arith.constant 0 : index
    %48 = vector.load %arg4[%c2_43, %c2_44, %c0_45, %c0_46] : memref<3x3x32x128xbf16, #tpu.memory_space<vmem>>, vector<1x1x32x128xbf16>
    %49 = vector.shape_cast %48 : vector<1x1x32x128xbf16> to vector<32x128xbf16>
    "tpu.trace_start"() <{level = 10 : i32, message = "hwc,cd->hwd"}> : () -> ()
    %cst_47 = arith.constant dense<0.000000e+00> : vector<16x16x128xf32>
    %50 = tpu.matmul %47, %49, %cst_47 {dimension_numbers = #tpu.dot_dimension_numbers<[2], [0], [0, 1], [1], [0, 0, 0, 1, 1, 1], [], []>} : vector<16x16x32xbf16>, vector<32x128xbf16>, vector<16x16x128xf32> -> vector<16x16x128xf32>
    "tpu.trace_stop"() : () -> ()
    %51 = arith.addf %46, %50 : vector<16x16x128xf32>
    %c0_i32 = arith.constant 0 : i32
    %52 = arith.cmpi eq, %arg2, %c0_i32 : i32
    %53 = arith.extui %52 : i1 to i32
    %c0_i32_48 = arith.constant 0 : i32
    %54 = arith.cmpi ne, %53, %c0_i32_48 : i32
    scf.if %54 {
      %c0_53 = arith.constant 0 : index
      %c0_54 = arith.constant 0 : index
      %c0_55 = arith.constant 0 : index
      %61 = vector.load %arg8[%c0_53, %c0_54, %c0_55] : memref<16x16x128xf32, #tpu.memory_space<vmem>>, vector<16x16x128xf32>
      tpu.vector_store %arg8[%c0_53, %c0_54, %c0_55], %51 {strides = array<i32>} : memref<16x16x128xf32, #tpu.memory_space<vmem>>, vector<16x16x128xf32>,
    } else {
    }
    %c0_i32_49 = arith.constant 0 : i32
    %55 = arith.cmpi sgt, %arg2, %c0_i32_49 : i32
    %56 = arith.extui %55 : i1 to i32
    %c0_i32_50 = arith.constant 0 : i32
    %57 = arith.cmpi ne, %56, %c0_i32_50 : i32
    scf.if %57 {
      %c0_53 = arith.constant 0 : index
      %c0_54 = arith.constant 0 : index
      %c0_55 = arith.constant 0 : index
      %61 = vector.load %arg8[%c0_53, %c0_54, %c0_55] : memref<16x16x128xf32, #tpu.memory_space<vmem>>, vector<16x16x128xf32>
      %62 = arith.addf %61, %51 : vector<16x16x128xf32>
      %c0_56 = arith.constant 0 : index
      %c0_57 = arith.constant 0 : index
      %c0_58 = arith.constant 0 : index
      %63 = vector.load %arg8[%c0_56, %c0_57, %c0_58] : memref<16x16x128xf32, #tpu.memory_space<vmem>>, vector<16x16x128xf32>
      tpu.vector_store %arg8[%c0_56, %c0_57, %c0_58], %62 {strides = array<i32>} : memref<16x16x128xf32, #tpu.memory_space<vmem>>, vector<16x16x128xf32>,
    } else {
    }
    %c0_i32_51 = arith.constant 0 : i32
    %58 = arith.cmpi eq, %arg2, %c0_i32_51 : i32
    %59 = arith.extui %58 : i1 to i32
    %c0_i32_52 = arith.constant 0 : i32
    %60 = arith.cmpi ne, %59, %c0_i32_52 : i32
    scf.if %60 {
      %c0_53 = arith.constant 0 : index
      %c0_54 = arith.constant 0 : index
      %c0_55 = arith.constant 0 : index
      %61 = vector.load %arg8[%c0_53, %c0_54, %c0_55] : memref<16x16x128xf32, #tpu.memory_space<vmem>>, vector<16x16x128xf32>
      %c0_56 = arith.constant 0 : index
      %c0_57 = arith.constant 0 : index
      %62 = vector.load %arg5[%c0_56, %c0_57] : memref<1x128xf32, #tpu.memory_space<vmem>>, vector<1x128xf32>
      %63 = vector.shape_cast %62 : vector<1x128xf32> to vector<1x1x128xf32>
      %64 = vector.broadcast %63 : vector<1x1x128xf32> to vector<16x16x128xf32>
      %65 = arith.mulf %61, %64 : vector<16x16x128xf32>
      %c0_58 = arith.constant 0 : index
      %c0_59 = arith.constant 0 : index
      %66 = vector.load %arg6[%c0_58, %c0_59] : memref<1x128xf32, #tpu.memory_space<vmem>>, vector<1x128xf32>
      %67 = vector.shape_cast %66 : vector<1x128xf32> to vector<1x1x128xf32>
      %68 = vector.broadcast %67 : vector<1x1x128xf32> to vector<16x16x128xf32>
      %69 = arith.addf %65, %68 : vector<16x16x128xf32>
      %cst_60 = arith.constant 0.000000e+00 : f32
      %70 = vector.broadcast %cst_60 : f32 to vector<16x16x128xf32>
      %71 = arith.maximumf %69, %70 : vector<16x16x128xf32>
      %c0_61 = arith.constant 0 : index
      %c0_62 = arith.constant 0 : index
      %c0_63 = arith.constant 0 : index
      %c0_64 = arith.constant 0 : index
      %72 = vector.load %arg7[%c0_61, %c0_62, %c0_63, %c0_64] : memref<1x16x16x128xf32, #tpu.memory_space<vmem>>, vector<1x16x16x128xf32>
      %73 = vector.shape_cast %72 : vector<1x16x16x128xf32> to vector<16x16x128xf32>
      %74 = vector.shape_cast %71 : vector<16x16x128xf32> to vector<1x16x16x128xf32>
      tpu.vector_store %arg7[%c0_61, %c0_62, %c0_63, %c0_64], %74 {strides = array<i32>} : memref<1x16x16x128xf32, #tpu.memory_space<vmem>>, vector<1x16x16x128xf32>,
    } else {
    }
    return
  }
  func.func @transform_0(%arg0: i32, %arg1: i32, %arg2: i32) -> (i32, i32, i32, i32) {
    %c0_i32 = arith.constant 0 : i32
    %c0_i32_0 = arith.constant 0 : i32
    %c0_i32_1 = arith.constant 0 : i32
    return %arg0, %c0_i32, %c0_i32_0, %arg2 : i32, i32, i32, i32
  }
  func.func @transform_1(%arg0: i32, %arg1: i32, %arg2: i32) -> (i32, i32, i32, i32) {
    %c0_i32 = arith.constant 0 : i32
    %c0_i32_0 = arith.constant 0 : i32
    %c0_i32_1 = arith.constant 0 : i32
    return %c0_i32, %c0_i32_0, %arg2, %arg1 : i32, i32, i32, i32
  }
  func.func @transform_2(%arg0: i32, %arg1: i32, %arg2: i32) -> (i32, i32) {
    %c0_i32 = arith.constant 0 : i32
    %c0_i32_0 = arith.constant 0 : i32
    return %c0_i32, %arg1 : i32, i32
  }
  func.func @transform_3(%arg0: i32, %arg1: i32, %arg2: i32) -> (i32, i32) {
    %c0_i32 = arith.constant 0 : i32
    %c0_i32_0 = arith.constant 0 : i32
    return %c0_i32, %arg1 : i32, i32
  }
  func.func @transform_4(%arg0: i32, %arg1: i32, %arg2: i32) -> (i32, i32, i32, i32) {
    %c0_i32 = arith.constant 0 : i32
    %c0_i32_0 = arith.constant 0 : i32
    %c0_i32_1 = arith.constant 0 : i32
    return %arg0, %c0_i32, %c0_i32_0, %arg1 : i32, i32, i32, i32
  }
}

</mosaic_0001>

<llo_original>
// kernel: _lambda_.2
$region0: #{_lambda_.2}
  #allocation0 [shape = 'u32[]', space=smem, size = 0x4, offset = 0x4, fixed_abs, tag = 'smem constant byte address 0x4 - core index']
  #allocation1 [shape = 'u32[72,128]{1,0:T(1,128)}', space=vmem, size = 0x9000, scoped, tag = 'internal scratch']
  %s0 = inlined_call_operand.vmem [shape: bf16[104,16], index: 0, kind: input, shape index: {}]
  %s1 = inlined_call_operand.vmem [shape: bf16[16,128], index: 1, kind: input, shape index: {}]
  %s2 = inlined_call_operand.vmem [shape: f32[1,128], index: 2, kind: input, shape index: {}]
  %s3 = inlined_call_operand.vmem [shape: f32[1,128], index: 3, kind: input, shape index: {}]
  %s4 = inlined_call_operand.vmem [shape: f32[104,128], index: 4, kind: output, shape index: {}]
  %s5 = sld [smem:[#allocation0]]
  $region26: #{_lambda_.2} parent=0
    _
  %s7 = ssub.s32 1, %s5
  %s8 = scalar_select 0, %s7, %s5
  // Predicated region
  $region2: #{_lambda_.2} parent=0 // pred_check
    _
  $region3: #{_lambda_.2} parent=0 // pred_check_branch
    %10 = sbr.rel (0) target = $region5
  $region4: #{_lambda_.2} parent=0 // pred_region
    _
  $region5: #{_lambda_.2} parent=0 // pred_fallthru
    _
  // Predicated region
  $region6: #{_lambda_.2} parent=0 // pred_check
    _
  $region7: #{_lambda_.2} parent=0 // pred_check_branch
    %12 = sbr.rel (0) target = $region9
  $region8: #{_lambda_.2} parent=0 // pred_region
    _
  $region9: #{_lambda_.2} parent=0 // pred_fallthru
    _
  // Predicated region
  $region10: #{_lambda_.2} parent=0 // pred_check
    _
  $region11: #{_lambda_.2} parent=0 // pred_check_branch
    %14 = sbr.rel (0) target = $region13
  $region12: #{_lambda_.2} parent=0 // pred_region
    _
  $region13: #{_lambda_.2} parent=0 // pred_fallthru
    _
  // Predicated region
  $region14: #{_lambda_.2} parent=0 // pred_check
    _
  $region15: #{_lambda_.2} parent=0 // pred_check_branch
    %16 = sbr.rel (0) target = $region17
  $region16: #{_lambda_.2} parent=0 // pred_region
    _
  $region17: #{_lambda_.2} parent=0 // pred_fallthru
    _
  %v18 = vld [vmem:[%s0] sm:$0xf]
  %v19 = vld [vmem:[%s0 + $0x4] sm:$0xf]
  %v20 = vld [vmem:[%s0 + $0x8] sm:$0xf]
  %v21 = vld [vmem:[%s0 + $0xc] sm:$0xf]
  %v22 = vld [vmem:[%s0 + $0x10] sm:$0xf]
  %v23 = vld [vmem:[%s0 + $0x14] sm:$0xf]
  %v24 = vld [vmem:[%s0 + $0x18] sm:$0xf]
  %v25 = vld [vmem:[%s0 + $0x1c] sm:$0xf]
  %v26 = vld [vmem:[%s0 + $0x20] sm:$0xf]
  %v27 = vld [vmem:[%s0 + $0x24] sm:$0xf]
  %v28 = vld [vmem:[%s0 + $0x28] sm:$0xf]
  %v29 = vld [vmem:[%s0 + $0x2c] sm:$0xf]
  %v30 = vld [vmem:[%s0 + $0x30] sm:$0xf]
  %v31 = vld [vmem:[%s1] sm:$0xf]
  %v32 = vld [vmem:[%s1 + $0x4] sm:$0xf]
  %v46 = vunpack.c.l.b16 %v18
  %v47 = vunpack.c.l.b16 %v19
  %v48 = vunpack.c.l.b16 %v20
  %v49 = vunpack.c.l.b16 %v21
  %v50 = vunpack.c.l.b16 %v22
  %v51 = vunpack.c.l.b16 %v23
  %v52 = vunpack.c.l.b16 %v24
  %v53 = vunpack.c.l.b16 %v25
  %v54 = vunpack.c.l.b16 %v26
  %v55 = vunpack.c.l.b16 %v27
  %v56 = vunpack.c.l.b16 %v28
  %v57 = vunpack.c.l.b16 %v29
  %v58 = vunpack.c.l.b16 %v30
  %v59 = vpack.c.b16 %v47, %v46
  %v60 = vpack.c.b16 %v49, %v48
  %v61 = vpack.c.b16 %v51, %v50
  %v62 = vpack.c.b16 %v53, %v52
  %v63 = vpack.c.b16 %v55, %v54
  %v64 = vpack.c.b16 %v57, %v56
  %v65 = vpack.c.b16 %v58, %v58
  %v68 = vunpack.c.l.b16 %v31
  %v69 = vunpack.c.l.b16 %v32
  %v70 = vpack.c.b16 %v69, %v68
  %vm72 = vcmask 130048
  %v74 = vsel %vm72, %v59, 0
  %v77 = vsel %vm72, %v60, 0
  %v80 = vsel %vm72, %v61, 0
  %v83 = vsel %vm72, %v62, 0
  %v86 = vsel %vm72, %v63, 0
  %v89 = vsel %vm72, %v64, 0
  %v92 = vsel %vm72, %v65, 0
  %94 = vmatpush.bf16.msra.mxu0 0
  %95 = vmatpush.bf16.msra.mxu0 0
  %96 = vmatpush.bf16.msra.mxu0 0
  %97 = vmatpush.bf16.msra.mxu0 0
  %98 = vmatpush.bf16.msra.mxu0 0
  %99 = vmatpush.bf16.msra.mxu0 0
  %100 = vmatpush.bf16.msra.mxu0 0
  %101 = vmatpush.bf16.msra.mxu0 %v70
  %102 = vmatmul.bf16.gmra.mxu0 %v74
  %v103 = vpop.f32.mrf.mxu0
  %v104 = vadd.f32 0.0, %v103
  %v105 = vpop.f32.mrf.mxu0
  %v106 = vadd.f32 0.0, %v105
  %107 = vmatmul.bf16.gmra.mxu0 %v77
  %v108 = vpop.f32.mrf.mxu0
  %v109 = vadd.f32 0.0, %v108
  %v110 = vpop.f32.mrf.mxu0
  %v111 = vadd.f32 0.0, %v110
  %112 = vmatmul.bf16.gmra.mxu0 %v80
  %v113 = vpop.f32.mrf.mxu0
  %v114 = vadd.f32 0.0, %v113
  %v115 = vpop.f32.mrf.mxu0
  %v116 = vadd.f32 0.0, %v115
  %117 = vmatmul.bf16.gmra.mxu0 %v83
  %v118 = vpop.f32.mrf.mxu0
  %v119 = vadd.f32 0.0, %v118
  %v120 = vpop.f32.mrf.mxu0
  %v121 = vadd.f32 0.0, %v120
  %122 = vmatmul.bf16.gmra.mxu0 %v86
  %v123 = vpop.f32.mrf.mxu0
  %v124 = vadd.f32 0.0, %v123
  %v125 = vpop.f32.mrf.mxu0
  %v126 = vadd.f32 0.0, %v125
  %127 = vmatmul.bf16.gmra.mxu0 %v89
  %v128 = vpop.f32.mrf.mxu0
  %v129 = vadd.f32 0.0, %v128
  %v130 = vpop.f32.mrf.mxu0
  %v131 = vadd.f32 0.0, %v130
  %132 = vmatmul.bf16.gmra.mxu0 %v92
  %v133 = vpop.f32.mrf.mxu0
  %v134 = vadd.f32 0.0, %v133
  %v135 = vpop.f32.mrf.mxu0
  %136 = vdwg.mxu0
  %v137 = vld [vmem:[%s2] sm:$0x1]
  %v139 = vperm.slane %v137, 0
  %v141 = vmul.f32 %v104, %v139
  %v142 = vmul.f32 %v106, %v139
  %v143 = vmul.f32 %v109, %v139
  %v144 = vmul.f32 %v111, %v139
  %v145 = vmul.f32 %v114, %v139
  %v146 = vmul.f32 %v116, %v139
  %v147 = vmul.f32 %v119, %v139
  %v148 = vmul.f32 %v121, %v139
  %v149 = vmul.f32 %v124, %v139
  %v150 = vmul.f32 %v126, %v139
  %v151 = vmul.f32 %v129, %v139
  %v152 = vmul.f32 %v131, %v139
  %v153 = vmul.f32 %v134, %v139
  %v154 = vld [vmem:[%s3] sm:$0x1]
  %v156 = vperm.slane %v154, 0
  %v158 = vadd.f32 %v141, %v156
  %v159 = vadd.f32 %v142, %v156
  %v160 = vadd.f32 %v143, %v156
  %v161 = vadd.f32 %v144, %v156
  %v162 = vadd.f32 %v145, %v156
  %v163 = vadd.f32 %v146, %v156
  %v164 = vadd.f32 %v147, %v156
  %v165 = vadd.f32 %v148, %v156
  %v166 = vadd.f32 %v149, %v156
  %v167 = vadd.f32 %v150, %v156
  %v168 = vadd.f32 %v151, %v156
  %v169 = vadd.f32 %v152, %v156
  %v170 = vadd.f32 %v153, %v156
  %v171 = vmax.f32 %v158, 0.0
  %v172 = vmax.f32 %v159, 0.0
  %v173 = vmax.f32 %v160, 0.0
  %v174 = vmax.f32 %v161, 0.0
  %v175 = vmax.f32 %v162, 0.0
  %v176 = vmax.f32 %v163, 0.0
  %v177 = vmax.f32 %v164, 0.0
  %v178 = vmax.f32 %v165, 0.0
  %v179 = vmax.f32 %v166, 0.0
  %v180 = vmax.f32 %v167, 0.0
  %v181 = vmax.f32 %v168, 0.0
  %v182 = vmax.f32 %v169, 0.0
  %v183 = vmax.f32 %v170, 0.0
  %184 = vst [vmem:[%s4] sm:$0xff] %v171
  %185 = vst [vmem:[%s4 + $0x8] sm:$0xff] %v172
  %186 = vst [vmem:[%s4 + $0x10] sm:$0xff] %v173
  %187 = vst [vmem:[%s4 + $0x18] sm:$0xff] %v174
  %188 = vst [vmem:[%s4 + $0x20] sm:$0xff] %v175
  %189 = vst [vmem:[%s4 + $0x28] sm:$0xff] %v176
  %190 = vst [vmem:[%s4 + $0x30] sm:$0xff] %v177
  %191 = vst [vmem:[%s4 + $0x38] sm:$0xff] %v178
  %192 = vst [vmem:[%s4 + $0x40] sm:$0xff] %v179
  %193 = vst [vmem:[%s4 + $0x48] sm:$0xff] %v180
  %194 = vst [vmem:[%s4 + $0x50] sm:$0xff] %v181
  %195 = vst [vmem:[%s4 + $0x58] sm:$0xff] %v182
  %196 = vst [vmem:[%s4 + $0x60] sm:$0xff] %v183
  // Predicated region
  $region18: #{_lambda_.2} parent=0 // pred_check
    _
  $region19: #{_lambda_.2} parent=0 // pred_check_branch
    %198 = sbr.rel (0) target = $region21
  $region20: #{_lambda_.2} parent=0 // pred_region
    _
  $region21: #{_lambda_.2} parent=0 // pred_fallthru
    _
  // Predicated region
  $region22: #{_lambda_.2} parent=0 // pred_check
    _
  $region23: #{_lambda_.2} parent=0 // pred_check_branch
    %200 = sbr.rel (0) target = $region25
  $region24: #{_lambda_.2} parent=0 // pred_region
    _
  $region25: #{_lambda_.2} parent=0 // pred_fallthru
    _

// kernel: _lambda_.3
$region0: #{_lambda_.3}
  #allocation0 [shape = 'u32[]', space=smem, size = 0x4, offset = 0x4, fixed_abs, tag = 'smem constant byte address 0x4 - core index']
  #allocation1 [shape = 'u32[72,128]{1,0:T(1,128)}', space=vmem, size = 0x9000, scoped, tag = 'internal scratch']
  #allocation2 [shape = 'f32[16,16,128]{2,1,0:T(8,128)}', space=vmem, size = 0x20000, scoped, tag = 'scratch operand']
  %s0 = inlined_call_operand.vmem [shape: bf16[2,16,16,32], index: 0, kind: input, shape index: {}]
  %s1 = inlined_call_operand.vmem [shape: bf16[3,3,32,128], index: 1, kind: input, shape index: {}]
  %s2 = inlined_call_operand.vmem [shape: f32[1,128], index: 2, kind: input, shape index: {}]
  %s3 = inlined_call_operand.vmem [shape: f32[1,128], index: 3, kind: input, shape index: {}]
  %s4 = inlined_call_operand.vmem [shape: f32[2,16,16,128], index: 4, kind: output, shape index: {}]
  %s5 = sld [smem:[#allocation0]]
  $region61: #{_lambda_.3} parent=0
    _
  %s7 = ssub.s32 1, %s5
  %s8 = scalar_select 0, %s7, %s5
  loop: start=0, step=1, limit=4
  $region2: #{_lambda_.3} parent=0 // loop_pre_header
    _
  $region3: #{_lambda_.3} parent=0 // loop_header
    %s10 = sphi 0, %s14
    %p11 = scmp.ge.s32.totalorder %s10, 4
    %s17 = sphi 0, %s36
    %s18 = sphi 0, %s32
    %s19 = sphi 0, %s28
    %s20 = sphi 0, %s17
    %s21 = sphi 0, %s18
    %s22 = sphi 0, %s19
    %s23 = sphi 0, %s20
    %s24 = sphi 0, %s21
    %s25 = sphi 0, %s22
    %s41 = sphi 0, %s43
    %s44 = sphi 0, %s41
    %s45 = sphi 0, %s44
    %s61 = sphi 0, %s45
    %s69 = sphi 0, %s71
    %s72 = sphi 0, %s69
    %s73 = sphi 0, %s72
    %s89 = sphi 0, %s73
    %s95 = sphi 0, %s97
    %s98 = sphi 0, %s95
    %s99 = sphi 0, %s98
    %s115 = sphi 0, %s99
    %s121 = sphi 0, %s123
    %s124 = sphi 0, %s121
    %s125 = sphi 0, %s124
    %s141 = sphi 0, %s125
    %s149 = sphi 0, %s151
    %s152 = sphi 0, %s149
    %s153 = sphi 0, %s152
    %s169 = sphi 0, %s153
  $region4: #{_lambda_.3} parent=0 // loop_header_branch
    %13 = sbr.rel (%p11) target = $region8
  $region5: #{_lambda_.3} parent=0 // loop_body
    %s15 = ssub.s32 %s10, 1
    %s16 = ssub.s32 %s10, 2
    %s26 = sadd.s32 1, %s19
    %p27 = scmp.ge.s32.totalorder %s26, 1
    %s28 = scalar_select %p27, 0, %s26
    %s29 = sadd.s32 1, %s18
    %s30 = scalar_select %p27, %s29, %s18
    %p31 = scmp.ge.s32.totalorder %s30, 1
    %s32 = scalar_select %p31, 0, %s30
    %s33 = sadd.s32 1, %s17
    %s34 = scalar_select %p31, %s33, %s17
    %p35 = scmp.ge.s32.totalorder %s34, 2
    %s36 = scalar_select %p35, 0, %s34
    %s37 = ssub.s32 %s17, %s36
    %s38 = ssub.s32 %s19, %s28
    %s39 = sor.u32 %s37, %s38
    %p40 = scmp.eq.s32.totalorder %s39, 0
    %s42 = sadd.s32 %s41, 1
    %s43 = scalar_select %p40, %s41, %s42
    %p46 = pneg %p40
    %p47 = scmp.eq.s32.totalorder %s10, 1
    %p48 = por %p46, %p47
    %p49 = scmp.ne.s32.totalorder %s41, %s44
    %p50 = scmp.eq.s32.totalorder %s10, 0
    %p51 = por %p49, %p50
    %p52 = scmp.ne.s32.totalorder %s41, %s44
    %p53 = scmp.eq.s32.totalorder %s15, 1
    %p54 = por %p52, %p53
    %p55 = scmp.ne.s32.totalorder %s44, %s45
    %p56 = scmp.eq.s32.totalorder %s15, 0
    %p57 = por %p55, %p56
    %p58 = scmp.ne.s32.totalorder %s44, %s45
    %p59 = scmp.eq.s32.totalorder %s16, 1
    %p60 = por %p58, %p59
    %p62 = scmp.ne.s32.totalorder %s45, %s61
    %p63 = scmp.eq.s32.totalorder %s16, 0
    %p64 = por %p62, %p63
    %s65 = ssub.s32 %s19, %s28
    %s66 = ssub.s32 %s18, %s32
    %s67 = sor.u32 %s65, %s66
    %p68 = scmp.eq.s32.totalorder %s67, 0
    %s70 = sadd.s32 %s69, 1
    %s71 = scalar_select %p68, %s69, %s70
    %p74 = pneg %p68
    %p75 = scmp.eq.s32.totalorder %s10, 1
    %p76 = por %p74, %p75
    %p77 = scmp.ne.s32.totalorder %s69, %s72
    %p78 = scmp.eq.s32.totalorder %s10, 0
    %p79 = por %p77, %p78
    %p80 = scmp.ne.s32.totalorder %s69, %s72
    %p81 = scmp.eq.s32.totalorder %s15, 1
    %p82 = por %p80, %p81
    %p83 = scmp.ne.s32.totalorder %s72, %s73
    %p84 = scmp.eq.s32.totalorder %s15, 0
    %p85 = por %p83, %p84
    %p86 = scmp.ne.s32.totalorder %s72, %s73
    %p87 = scmp.eq.s32.totalorder %s16, 1
    %p88 = por %p86, %p87
    %p90 = scmp.ne.s32.totalorder %s73, %s89
    %p91 = scmp.eq.s32.totalorder %s16, 0
    %p92 = por %p90, %p91
    %s93 = ssub.s32 %s18, %s32
    %p94 = scmp.eq.s32.totalorder %s93, 0
    %s96 = sadd.s32 %s95, 1
    %s97 = scalar_select %p94, %s95, %s96
    %p100 = pneg %p94
    %p101 = scmp.eq.s32.totalorder %s10, 1
    %p102 = por %p100, %p101
    %p103 = scmp.ne.s32.totalorder %s95, %s98
    %p104 = scmp.eq.s32.totalorder %s10, 0
    %p105 = por %p103, %p104
    %p106 = scmp.ne.s32.totalorder %s95, %s98
    %p107 = scmp.eq.s32.totalorder %s15, 1
    %p108 = por %p106, %p107
    %p109 = scmp.ne.s32.totalorder %s98, %s99
    %p110 = scmp.eq.s32.totalorder %s15, 0
    %p111 = por %p109, %p110
    %p112 = scmp.ne.s32.totalorder %s98, %s99
    %p113 = scmp.eq.s32.totalorder %s16, 1
    %p114 = por %p112, %p113
    %p116 = scmp.ne.s32.totalorder %s99, %s115
    %p117 = scmp.eq.s32.totalorder %s16, 0
    %p118 = por %p116, %p117
    %s119 = ssub.s32 %s18, %s32
    %p120 = scmp.eq.s32.totalorder %s119, 0
    %s122 = sadd.s32 %s121, 1
    %s123 = scalar_select %p120, %s121, %s122
    %p126 = pneg %p120
    %p127 = scmp.eq.s32.totalorder %s10, 1
    %p128 = por %p126, %p127
    %p129 = scmp.ne.s32.totalorder %s121, %s124
    %p130 = scmp.eq.s32.totalorder %s10, 0
    %p131 = por %p129, %p130
    %p132 = scmp.ne.s32.totalorder %s121, %s124
    %p133 = scmp.eq.s32.totalorder %s15, 1
    %p134 = por %p132, %p133
    %p135 = scmp.ne.s32.totalorder %s124, %s125
    %p136 = scmp.eq.s32.totalorder %s15, 0
    %p137 = por %p135, %p136
    %p138 = scmp.ne.s32.totalorder %s124, %s125
    %p139 = scmp.eq.s32.totalorder %s16, 1
    %p140 = por %p138, %p139
    %p142 = scmp.ne.s32.totalorder %s125, %s141
    %p143 = scmp.eq.s32.totalorder %s16, 0
    %p144 = por %p142, %p143
    %s145 = ssub.s32 %s17, %s36
    %s146 = ssub.s32 %s18, %s32
    %s147 = sor.u32 %s145, %s146
    %p148 = scmp.eq.s32.totalorder %s147, 0
    %s150 = sadd.s32 %s149, 1
    %s151 = scalar_select %p148, %s149, %s150
    %p154 = pneg %p148
    %p155 = scmp.eq.s32.totalorder %s10, 1
    %p156 = por %p154, %p155
    %p157 = scmp.ne.s32.totalorder %s149, %s152
    %p158 = scmp.eq.s32.totalorder %s10, 0
    %p159 = por %p157, %p158
    %p160 = scmp.ne.s32.totalorder %s149, %s152
    %p161 = scmp.eq.s32.totalorder %s15, 1
    %p162 = por %p160, %p161
    %p163 = scmp.ne.s32.totalorder %s152, %s153
    %p164 = scmp.eq.s32.totalorder %s15, 0
    %p165 = por %p163, %p164
    %p166 = scmp.ne.s32.totalorder %s152, %s153
    %p167 = scmp.eq.s32.totalorder %s16, 1
    %p168 = por %p166, %p167
    %p170 = scmp.ne.s32.totalorder %s153, %s169
    %p171 = scmp.eq.s32.totalorder %s16, 0
    %p172 = por %p170, %p171
    %p173 = scmp.le.s32.totalorder 1, %s10
    %p174 = scmp.lt.s32.totalorder %s10, 3
    %p175 = pnand %p173, %p174
    %p176 = pneg %p175
    // Predicated region
    $region9: #{_lambda_.3} parent=5 // pred_check
      _
    $region10: #{_lambda_.3} parent=5 // pred_check_branch
      %178 = sbr.rel (%p175) target = $region12
    $region11: #{_lambda_.3} parent=5 // pred_region
      %s179 = ssub.s32 %s10, 1
      // Predicated region
      $region13: #{_lambda_.3} parent=11 // pred_check
        %p180 = pneg %p85
      $region14: #{_lambda_.3} parent=11 // pred_check_branch
        %182 = sbr.rel (%p180) target = $region16
      $region15: #{_lambda_.3} parent=11 // pred_region
        %s183 = smul.u32 4, %s22
        %p184 = scmp.lt.s32.totalorder %s183, 3
        %s185 = scalar_select %p184, %s183, 3
        %p186 = scmp.lt.s32.totalorder %s21, 0
        %s187 = scalar_select %p186, %s21, 0
        %s188 = sadd.s32 %s187, %s185
        %s189 = smul.addr %s188, 4
        %s190 = scalar_lea.vmem %s1, %s189
        %s191 = smul.u32 4, %s22
      $region16: #{_lambda_.3} parent=11 // pred_fallthru
        _
      // Predicated region
      $region17: #{_lambda_.3} parent=11 // pred_check
        %p192 = pneg %p111
      $region18: #{_lambda_.3} parent=11 // pred_check_branch
        %194 = sbr.rel (%p192) target = $region20
      $region19: #{_lambda_.3} parent=11 // pred_region
        %p195 = scmp.lt.s32.totalorder %s21, 0
        %s196 = scalar_select %p195, %s21, 0
        %s197 = scalar_lea.vmem %s2, %s196
      $region20: #{_lambda_.3} parent=11 // pred_fallthru
        _
      // Predicated region
      $region21: #{_lambda_.3} parent=11 // pred_check
        %p198 = pneg %p137
      $region22: #{_lambda_.3} parent=11 // pred_check_branch
        %200 = sbr.rel (%p198) target = $region24
      $region23: #{_lambda_.3} parent=11 // pred_region
        %p201 = scmp.lt.s32.totalorder %s21, 0
        %s202 = scalar_select %p201, %s21, 0
        %s203 = scalar_lea.vmem %s3, %s202
      $region24: #{_lambda_.3} parent=11 // pred_fallthru
        _
    $region12: #{_lambda_.3} parent=5 // pred_fallthru
      _
    %p204 = scmp.lt.s32.totalorder %s10, 2
    // Predicated region
    $region25: #{_lambda_.3} parent=5 // pred_check
      %p205 = pneg %p204
    $region26: #{_lambda_.3} parent=5 // pred_check_branch
      %207 = sbr.rel (%p205) target = $region28
    $region27: #{_lambda_.3} parent=5 // pred_region
      // Predicated region
      $region29: #{_lambda_.3} parent=27 // pred_check
        %p208 = pneg %p51
      $region30: #{_lambda_.3} parent=27 // pred_check_branch
        %210 = sbr.rel (%p208) target = $region32
      $region31: #{_lambda_.3} parent=27 // pred_region
        %p211 = scmp.lt.s32.totalorder %s17, 1
        %s212 = scalar_select %p211, %s17, 1
        %p213 = scmp.lt.s32.totalorder %s19, 0
        %s214 = scalar_select %p213, %s19, 0
        %s215 = smul.addr %s212, 32
        %s216 = sadd.s32 %s214, %s215
        %s217 = smul.addr %s216, 4
        %s218 = scalar_lea.vmem %s0, %s217
      $region32: #{_lambda_.3} parent=27 // pred_fallthru
        _
    $region28: #{_lambda_.3} parent=5 // pred_fallthru
      _
    %p219 = scmp.le.s32.totalorder 1, %s10
    %p220 = scmp.lt.s32.totalorder %s10, 3
    %p221 = pnand %p219, %p220
    %p222 = pneg %p221
    // Predicated region
    $region33: #{_lambda_.3} parent=5 // pred_check
      _
    $region34: #{_lambda_.3} parent=5 // pred_check_branch
      %224 = sbr.rel (%p221) target = $region36
    $region35: #{_lambda_.3} parent=5 // pred_region
      %s225 = ssub.s32 %s10, 1
      %p226 = scmp.lt.s32.totalorder %s20, 1
      %s227 = scalar_select %p226, %s20, 1
      %p228 = scmp.lt.s32.totalorder %s22, 0
      %s229 = scalar_select %p228, %s22, 0
      %s230 = smul.addr %s227, 32
      %s231 = sadd.s32 %s229, %s230
      %s232 = smul.addr %s231, 4
      %s233 = scalar_lea.vmem %s0, %s232
      %p234 = pneg %p57
      %p235 = pneg %p54
      %s236 = smul.u32 4, %s22
      %p237 = scmp.lt.s32.totalorder %s236, 3
      %s238 = scalar_select %p237, %s236, 3
      %p239 = scmp.lt.s32.totalorder %s21, 0
      %s240 = scalar_select %p239, %s21, 0
      %s241 = sadd.s32 %s240, %s238
      %s242 = smul.addr %s241, 4
      %s243 = scalar_lea.vmem %s1, %s242
      %p244 = pneg %p85
      %p245 = pneg %p82
      %p246 = scmp.lt.s32.totalorder %s21, 0
      %s247 = scalar_select %p246, %s21, 0
      %s248 = scalar_lea.vmem %s2, %s247
      %p249 = pneg %p111
      %p250 = pneg %p108
      %p251 = scmp.lt.s32.totalorder %s21, 0
      %s252 = scalar_select %p251, %s21, 0
      %s253 = scalar_lea.vmem %s3, %s252
      %p254 = pneg %p137
      %p255 = pneg %p134
      %p256 = pneg %p165
      %p257 = pneg %p162
      %p258 = scmp.lt.s32.totalorder %s20, 1
      %s259 = scalar_select %p258, %s20, 1
      %p260 = scmp.lt.s32.totalorder %s21, 0
      %s261 = scalar_select %p260, %s21, 0
      %s262 = smul.addr %s259, 32
      %s263 = sadd.s32 %s261, %s262
      %s264 = smul.addr %s263, 8
      %s265 = scalar_lea.vmem %s4, %s264
      %p266 = scmp.lt.s32.totalorder %s20, 1
      %s267 = scalar_select %p266, %s20, 1
      %p268 = scmp.lt.s32.totalorder %s22, 0
      %s269 = scalar_select %p268, %s22, 0
      %s270 = smul.addr %s267, 32
      %s271 = sadd.s32 %s269, %s270
      %s272 = smul.addr %s271, 4
      %s273 = scalar_lea.vmem %s0, %s272
      %s274 = smul.u32 4, %s22
      %p275 = scmp.lt.s32.totalorder %s274, 3
      %s276 = scalar_select %p275, %s274, 3
      %p277 = scmp.lt.s32.totalorder %s21, 0
      %s278 = scalar_select %p277, %s21, 0
      %s279 = sadd.s32 %s278, %s276
      %s280 = smul.addr %s279, 4
      %s281 = scalar_lea.vmem %s1, %s280
      %s282 = smul.u32 4, %s22
      %p283 = scmp.lt.s32.totalorder %s21, 0
      %s284 = scalar_select %p283, %s21, 0
      %s285 = scalar_lea.vmem %s2, %s284
      %p286 = scmp.lt.s32.totalorder %s21, 0
      %s287 = scalar_select %p286, %s21, 0
      %s288 = scalar_lea.vmem %s3, %s287
      %p289 = scmp.lt.s32.totalorder %s20, 1
      %s290 = scalar_select %p289, %s20, 1
      %p291 = scmp.lt.s32.totalorder %s21, 0
      %s292 = scalar_select %p291, %s21, 0
      %s293 = smul.addr %s290, 32
      %s294 = sadd.s32 %s292, %s293
      %s295 = smul.addr %s294, 8
      %s296 = scalar_lea.vmem %s4, %s295
      %v298 = vld [vmem:[%s273] sm:$0xf]
      %v299 = vld [vmem:[%s273 + $0x4] sm:$0xf]
      %v300 = vld [vmem:[%s273 + $0x8] sm:$0xf]
      %v301 = vld [vmem:[%s273 + $0xc] sm:$0xf]
      %v302 = vld [vmem:[%s273 + $0x10] sm:$0xf]
      %v303 = vld [vmem:[%s273 + $0x14] sm:$0xf]
      %v304 = vld [vmem:[%s273 + $0x18] sm:$0xf]
      %v305 = vld [vmem:[%s273 + $0x1c] sm:$0xf]
      %v306 = vld [vmem:[%s273 + $0x20] sm:$0xf]
      %v307 = vld [vmem:[%s273 + $0x24] sm:$0xf]
      %v308 = vld [vmem:[%s273 + $0x28] sm:$0xf]
      %v309 = vld [vmem:[%s273 + $0x2c] sm:$0xf]
      %v310 = vld [vmem:[%s273 + $0x30] sm:$0xf]
      %v311 = vld [vmem:[%s273 + $0x34] sm:$0xf]
      %v312 = vld [vmem:[%s273 + $0x38] sm:$0xf]
      %v313 = vld [vmem:[%s273 + $0x3c] sm:$0xf]
      %v314 = vld [vmem:[%s273 + $0x40] sm:$0xf]
      %v315 = vld [vmem:[%s273 + $0x44] sm:$0xf]
      %v316 = vld [vmem:[%s273 + $0x48] sm:$0xf]
      %v317 = vld [vmem:[%s273 + $0x4c] sm:$0xf]
      %v318 = vld [vmem:[%s273 + $0x50] sm:$0xf]
      %v319 = vld [vmem:[%s273 + $0x54] sm:$0xf]
      %v320 = vld [vmem:[%s273 + $0x58] sm:$0xf]
      %v321 = vld [vmem:[%s273 + $0x5c] sm:$0xf]
      %v322 = vld [vmem:[%s273 + $0x60] sm:$0xf]
      %v323 = vld [vmem:[%s273 + $0x64] sm:$0xf]
      %v324 = vld [vmem:[%s273 + $0x68] sm:$0xf]
      %v325 = vld [vmem:[%s273 + $0x6c] sm:$0xf]
      %v326 = vld [vmem:[%s273 + $0x70] sm:$0xf]
      %v327 = vld [vmem:[%s273 + $0x74] sm:$0xf]
      %v328 = vld [vmem:[%s273 + $0x78] sm:$0xf]
      %v329 = vld [vmem:[%s273 + $0x7c] sm:$0xf]
      %v362 = vunpack.c.l.b16 %v298
      %v363 = vunpack.c.l.b16 %v299
      %v364 = vunpack.c.l.b16 %v300
      %v365 = vunpack.c.l.b16 %v301
      %v366 = vunpack.c.l.b16 %v302
      %v367 = vunpack.c.l.b16 %v303
      %v368 = vunpack.c.l.b16 %v304
      %v369 = vunpack.c.l.b16 %v305
      %v370 = vunpack.c.l.b16 %v306
      %v371 = vunpack.c.l.b16 %v307
      %v372 = vunpack.c.l.b16 %v308
      %v373 = vunpack.c.l.b16 %v309
      %v374 = vunpack.c.l.b16 %v310
      %v375 = vunpack.c.l.b16 %v311
      %v376 = vunpack.c.l.b16 %v312
      %v377 = vunpack.c.l.b16 %v313
      %v378 = vunpack.c.l.b16 %v314
      %v379 = vunpack.c.l.b16 %v315
      %v380 = vunpack.c.l.b16 %v316
      %v381 = vunpack.c.l.b16 %v317
      %v382 = vunpack.c.l.b16 %v318
      %v383 = vunpack.c.l.b16 %v319
      %v384 = vunpack.c.l.b16 %v320
      %v385 = vunpack.c.l.b16 %v321
      %v386 = vunpack.c.l.b16 %v322
      %v387 = vunpack.c.l.b16 %v323
      %v388 = vunpack.c.l.b16 %v324
      %v389 = vunpack.c.l.b16 %v325
      %v390 = vunpack.c.l.b16 %v326
      %v391 = vunpack.c.l.b16 %v327
      %v392 = vunpack.c.l.b16 %v328
      %v393 = vunpack.c.l.b16 %v329
      %v394 = vpack.c.b16 %v363, %v362
      %v395 = vpack.c.b16 %v365, %v364
      %v396 = vpack.c.b16 %v367, %v366
      %v397 = vpack.c.b16 %v369, %v368
      %v398 = vpack.c.b16 %v371, %v370
      %v399 = vpack.c.b16 %v373, %v372
      %v400 = vpack.c.b16 %v375, %v374
      %v401 = vpack.c.b16 %v377, %v376
      %v402 = vpack.c.b16 %v379, %v378
      %v403 = vpack.c.b16 %v381, %v380
      %v404 = vpack.c.b16 %v383, %v382
      %v405 = vpack.c.b16 %v385, %v384
      %v406 = vpack.c.b16 %v387, %v386
      %v407 = vpack.c.b16 %v389, %v388
      %v408 = vpack.c.b16 %v391, %v390
      %v409 = vpack.c.b16 %v393, %v392
      %v411 = vshrl.u32 0, 16
      %v413 = vrot.slane %v411, 7
      %v414 = vshll.u32 0, 16
      %v416 = vor.u32 %v413, %v414
      %v418 = vshrl.u32 %v394, 16
      %v420 = vrot.slane %v418, 7
      %v421 = vshll.u32 %v394, 16
      %v423 = vor.u32 %v420, %v421
      %v425 = vshrl.u32 %v395, 16
      %v427 = vrot.slane %v425, 7
      %v428 = vshll.u32 %v395, 16
      %v430 = vor.u32 %v427, %v428
      %v432 = vshrl.u32 %v396, 16
      %v434 = vrot.slane %v432, 7
      %v435 = vshll.u32 %v396, 16
      %v437 = vor.u32 %v434, %v435
      %v439 = vshrl.u32 %v397, 16
      %v441 = vrot.slane %v439, 7
      %v442 = vshll.u32 %v397, 16
      %v444 = vor.u32 %v441, %v442
      %v446 = vshrl.u32 %v398, 16
      %v448 = vrot.slane %v446, 7
      %v449 = vshll.u32 %v398, 16
      %v451 = vor.u32 %v448, %v449
      %v453 = vshrl.u32 %v399, 16
      %v455 = vrot.slane %v453, 7
      %v456 = vshll.u32 %v399, 16
      %v458 = vor.u32 %v455, %v456
      %v460 = vshrl.u32 %v400, 16
      %v462 = vrot.slane %v460, 7
      %v463 = vshll.u32 %v400, 16
      %v465 = vor.u32 %v462, %v463
      %v467 = vshrl.u32 %v401, 16
      %v469 = vrot.slane %v467, 7
      %v470 = vshll.u32 %v401, 16
      %v472 = vor.u32 %v469, %v470
      %v474 = vshrl.u32 %v402, 16
      %v476 = vrot.slane %v474, 7
      %v477 = vshll.u32 %v402, 16
      %v479 = vor.u32 %v476, %v477
      %v481 = vshrl.u32 %v403, 16
      %v483 = vrot.slane %v481, 7
      %v484 = vshll.u32 %v403, 16
      %v486 = vor.u32 %v483, %v484
      %v488 = vshrl.u32 %v404, 16
      %v490 = vrot.slane %v488, 7
      %v491 = vshll.u32 %v404, 16
      %v493 = vor.u32 %v490, %v491
      %v495 = vshrl.u32 %v405, 16
      %v497 = vrot.slane %v495, 7
      %v498 = vshll.u32 %v405, 16
      %v500 = vor.u32 %v497, %v498
      %v502 = vshrl.u32 %v406, 16
      %v504 = vrot.slane %v502, 7
      %v505 = vshll.u32 %v406, 16
      %v507 = vor.u32 %v504, %v505
      %v509 = vshrl.u32 %v407, 16
      %v511 = vrot.slane %v509, 7
      %v512 = vshll.u32 %v407, 16
      %v514 = vor.u32 %v511, %v512
      %v516 = vshrl.u32 %v408, 16
      %v518 = vrot.slane %v516, 7
      %v519 = vshll.u32 %v408, 16
      %v521 = vor.u32 %v518, %v519
      %v523 = vshrl.u32 %v409, 16
      %v525 = vrot.slane %v523, 7
      %v526 = vshll.u32 %v409, 16
      %v528 = vor.u32 %v525, %v526
      %vm563 = vcmask 1040384
      %vm564 = vsmask.f32 256
      %vm565 = vmand %vm563, %vm564
      %v566 = vsel %vm565, 0, %v416
      %v567 = vsel %vm565, 0, %v423
      %v568 = vsel %vm565, 0, %v430
      %v569 = vsel %vm565, 0, %v437
      %v570 = vsel %vm565, 0, %v444
      %v571 = vsel %vm565, 0, %v451
      %v572 = vsel %vm565, 0, %v458
      %v573 = vsel %vm565, 0, %v465
      %v574 = vsel %vm565, 0, %v472
      %v575 = vsel %vm565, 0, %v479
      %v576 = vsel %vm565, 0, %v486
      %v577 = vsel %vm565, 0, %v493
      %v578 = vsel %vm565, 0, %v500
      %v579 = vsel %vm565, 0, %v507
      %v580 = vsel %vm565, 0, %v514
      %v581 = vsel %vm565, 0, %v521
      %v582 = vsel %vm565, 0, %v528
      %v583 = vsel %vm565, %v413, 0
      %v584 = vsel %vm565, %v420, 0
      %v585 = vsel %vm565, %v427, 0
      %v586 = vsel %vm565, %v434, 0
      %v587 = vsel %vm565, %v441, 0
      %v588 = vsel %vm565, %v448, 0
      %v589 = vsel %vm565, %v455, 0
      %v590 = vsel %vm565, %v462, 0
      %v591 = vsel %vm565, %v469, 0
      %v592 = vsel %vm565, %v476, 0
      %v593 = vsel %vm565, %v483, 0
      %v594 = vsel %vm565, %v490, 0
      %v595 = vsel %vm565, %v497, 0
      %v596 = vsel %vm565, %v504, 0
      %v597 = vsel %vm565, %v511, 0
      %v598 = vsel %vm565, %v518, 0
      %v599 = vsel %vm565, %v525, 0
      %v600 = vld [vmem:[%s281] sm:$0xf]
      %v601 = vld [vmem:[%s281 + $0x4] sm:$0xf]
      %v602 = vld [vmem:[%s281 + $0x8] sm:$0xf]
      %v603 = vld [vmem:[%s281 + $0xc] sm:$0xf]
      %s604 = scalar_lea.vmem %s281, 16
      %v605 = vld [vmem:[%s604] sm:$0xf]
      %v606 = vld [vmem:[%s604 + $0x4] sm:$0xf]
      %v607 = vld [vmem:[%s604 + $0x8] sm:$0xf]
      %v608 = vld [vmem:[%s604 + $0xc] sm:$0xf]
      %vm609 = vsmask.f32 7424
      %v611 = vshrl.u32 %v566, 16
      %v613 = vshll.u32 %v566, 16
      %v615 = vrot.slane %v613, 1
      %v616 = vor.u32 %v611, %v615
      %v618 = vshll.u32 %v583, 16
      %v620 = vrot.slane %v618, 1
      %v621 = vsel %vm609, %v616, %v620
      %v623 = vshrl.u32 %v567, 16
      %v625 = vshll.u32 %v567, 16
      %v627 = vrot.slane %v625, 1
      %v628 = vor.u32 %v623, %v627
      %v630 = vshll.u32 %v584, 16
      %v632 = vrot.slane %v630, 1
      %v633 = vsel %vm609, %v628, %v632
      %v635 = vshrl.u32 %v568, 16
      %v637 = vshll.u32 %v568, 16
      %v639 = vrot.slane %v637, 1
      %v640 = vor.u32 %v635, %v639
      %v642 = vshll.u32 %v585, 16
      %v644 = vrot.slane %v642, 1
      %v645 = vsel %vm609, %v640, %v644
      %v647 = vshrl.u32 %v569, 16
      %v649 = vshll.u32 %v569, 16
      %v651 = vrot.slane %v649, 1
      %v652 = vor.u32 %v647, %v651
      %v654 = vshll.u32 %v586, 16
      %v656 = vrot.slane %v654, 1
      %v657 = vsel %vm609, %v652, %v656
      %v659 = vshrl.u32 %v570, 16
      %v661 = vshll.u32 %v570, 16
      %v663 = vrot.slane %v661, 1
      %v664 = vor.u32 %v659, %v663
      %v666 = vshll.u32 %v587, 16
      %v668 = vrot.slane %v666, 1
      %v669 = vsel %vm609, %v664, %v668
      %v671 = vshrl.u32 %v571, 16
      %v673 = vshll.u32 %v571, 16
      %v675 = vrot.slane %v673, 1
      %v676 = vor.u32 %v671, %v675
      %v678 = vshll.u32 %v588, 16
      %v680 = vrot.slane %v678, 1
      %v681 = vsel %vm609, %v676, %v680
      %v683 = vshrl.u32 %v572, 16
      %v685 = vshll.u32 %v572, 16
      %v687 = vrot.slane %v685, 1
      %v688 = vor.u32 %v683, %v687
      %v690 = vshll.u32 %v589, 16
      %v692 = vrot.slane %v690, 1
      %v693 = vsel %vm609, %v688, %v692
      %v695 = vshrl.u32 %v573, 16
      %v697 = vshll.u32 %v573, 16
      %v699 = vrot.slane %v697, 1
      %v700 = vor.u32 %v695, %v699
      %v702 = vshll.u32 %v590, 16
      %v704 = vrot.slane %v702, 1
      %v705 = vsel %vm609, %v700, %v704
      %v707 = vshrl.u32 %v574, 16
      %v709 = vshll.u32 %v574, 16
      %v711 = vrot.slane %v709, 1
      %v712 = vor.u32 %v707, %v711
      %v714 = vshll.u32 %v591, 16
      %v716 = vrot.slane %v714, 1
      %v717 = vsel %vm609, %v712, %v716
      %v719 = vshrl.u32 %v575, 16
      %v721 = vshll.u32 %v575, 16
      %v723 = vrot.slane %v721, 1
      %v724 = vor.u32 %v719, %v723
      %v726 = vshll.u32 %v592, 16
      %v728 = vrot.slane %v726, 1
      %v729 = vsel %vm609, %v724, %v728
      %v731 = vshrl.u32 %v576, 16
      %v733 = vshll.u32 %v576, 16
      %v735 = vrot.slane %v733, 1
      %v736 = vor.u32 %v731, %v735
      %v738 = vshll.u32 %v593, 16
      %v740 = vrot.slane %v738, 1
      %v741 = vsel %vm609, %v736, %v740
      %v743 = vshrl.u32 %v577, 16
      %v745 = vshll.u32 %v577, 16
      %v747 = vrot.slane %v745, 1
      %v748 = vor.u32 %v743, %v747
      %v750 = vshll.u32 %v594, 16
      %v752 = vrot.slane %v750, 1
      %v753 = vsel %vm609, %v748, %v752
      %v755 = vshrl.u32 %v578, 16
      %v757 = vshll.u32 %v578, 16
      %v759 = vrot.slane %v757, 1
      %v760 = vor.u32 %v755, %v759
      %v762 = vshll.u32 %v595, 16
      %v764 = vrot.slane %v762, 1
      %v765 = vsel %vm609, %v760, %v764
      %v767 = vshrl.u32 %v579, 16
      %v769 = vshll.u32 %v579, 16
      %v771 = vrot.slane %v769, 1
      %v772 = vor.u32 %v767, %v771
      %v774 = vshll.u32 %v596, 16
      %v776 = vrot.slane %v774, 1
      %v777 = vsel %vm609, %v772, %v776
      %v779 = vshrl.u32 %v580, 16
      %v781 = vshll.u32 %v580, 16
      %v783 = vrot.slane %v781, 1
      %v784 = vor.u32 %v779, %v783
      %v786 = vshll.u32 %v597, 16
      %v788 = vrot.slane %v786, 1
      %v789 = vsel %vm609, %v784, %v788
      %v791 = vshrl.u32 %v581, 16
      %v793 = vshll.u32 %v581, 16
      %v795 = vrot.slane %v793, 1
      %v796 = vor.u32 %v791, %v795
      %v798 = vshll.u32 %v598, 16
      %v800 = vrot.slane %v798, 1
      %v801 = vsel %vm609, %v796, %v800
      %v806 = vunpack.c.l.b16 %v605
      %v807 = vunpack.c.l.b16 %v606
      %v808 = vunpack.c.l.b16 %v607
      %v809 = vunpack.c.l.b16 %v608
      %v810 = vpack.c.b16 %v807, %v806
      %v811 = vpack.c.b16 %v809, %v808
      %vm814 = vcmask 261120
      %v816 = vsel %vm814, %v621, 0
      %v819 = vsel %vm814, %v633, 0
      %v822 = vsel %vm814, %v645, 0
      %v825 = vsel %vm814, %v657, 0
      %v828 = vsel %vm814, %v669, 0
      %v831 = vsel %vm814, %v681, 0
      %v834 = vsel %vm814, %v693, 0
      %v837 = vsel %vm814, %v705, 0
      %v840 = vsel %vm814, %v717, 0
      %v843 = vsel %vm814, %v729, 0
      %v846 = vsel %vm814, %v741, 0
      %v849 = vsel %vm814, %v753, 0
      %v852 = vsel %vm814, %v765, 0
      %v855 = vsel %vm814, %v777, 0
      %v858 = vsel %vm814, %v789, 0
      %v861 = vsel %vm814, %v801, 0
      %863 = vmatpush.bf16.msra.mxu0 0
      %864 = vmatpush.bf16.msra.mxu0 0
      %865 = vmatpush.bf16.msra.mxu0 0
      %866 = vmatpush.bf16.msra.mxu0 0
      %867 = vmatpush.bf16.msra.mxu0 0
      %868 = vmatpush.bf16.msra.mxu0 0
      %869 = vmatpush.bf16.msra.mxu0 %v811
      %870 = vmatpush.bf16.msra.mxu0 %v810
      %871 = vmatmul.bf16.gmra.mxu0 %v816
      %v872 = vpop.f32.mrf.mxu0
      %v873 = vadd.f32 0.0, %v872
      %v874 = vpop.f32.mrf.mxu0
      %v875 = vadd.f32 0.0, %v874
      %876 = vmatmul.bf16.gmra.mxu0 %v819
      %v877 = vpop.f32.mrf.mxu0
      %v878 = vadd.f32 0.0, %v877
      %v879 = vpop.f32.mrf.mxu0
      %v880 = vadd.f32 0.0, %v879
      %881 = vmatmul.bf16.gmra.mxu0 %v822
      %v882 = vpop.f32.mrf.mxu0
      %v883 = vadd.f32 0.0, %v882
      %v884 = vpop.f32.mrf.mxu0
      %v885 = vadd.f32 0.0, %v884
      %886 = vmatmul.bf16.gmra.mxu0 %v825
      %v887 = vpop.f32.mrf.mxu0
      %v888 = vadd.f32 0.0, %v887
      %v889 = vpop.f32.mrf.mxu0
      %v890 = vadd.f32 0.0, %v889
      %891 = vmatmul.bf16.gmra.mxu0 %v828
      %v892 = vpop.f32.mrf.mxu0
      %v893 = vadd.f32 0.0, %v892
      %v894 = vpop.f32.mrf.mxu0
      %v895 = vadd.f32 0.0, %v894
      %896 = vmatmul.bf16.gmra.mxu0 %v831
      %v897 = vpop.f32.mrf.mxu0
      %v898 = vadd.f32 0.0, %v897
      %v899 = vpop.f32.mrf.mxu0
      %v900 = vadd.f32 0.0, %v899
      %901 = vmatmul.bf16.gmra.mxu0 %v834
      %v902 = vpop.f32.mrf.mxu0
      %v903 = vadd.f32 0.0, %v902
      %v904 = vpop.f32.mrf.mxu0
      %v905 = vadd.f32 0.0, %v904
      %906 = vmatmul.bf16.gmra.mxu0 %v837
      %v907 = vpop.f32.mrf.mxu0
      %v908 = vadd.f32 0.0, %v907
      %v909 = vpop.f32.mrf.mxu0
      %v910 = vadd.f32 0.0, %v909
      %911 = vmatmul.bf16.gmra.mxu0 %v840
      %v912 = vpop.f32.mrf.mxu0
      %v913 = vadd.f32 0.0, %v912
      %v914 = vpop.f32.mrf.mxu0
      %v915 = vadd.f32 0.0, %v914
      %916 = vmatmul.bf16.gmra.mxu0 %v843
      %v917 = vpop.f32.mrf.mxu0
      %v918 = vadd.f32 0.0, %v917
      %v919 = vpop.f32.mrf.mxu0
      %v920 = vadd.f32 0.0, %v919
      %921 = vmatmul.bf16.gmra.mxu0 %v846
      %v922 = vpop.f32.mrf.mxu0
      %v923 = vadd.f32 0.0, %v922
      %v924 = vpop.f32.mrf.mxu0
      %v925 = vadd.f32 0.0, %v924
      %926 = vmatmul.bf16.gmra.mxu0 %v849
      %v927 = vpop.f32.mrf.mxu0
      %v928 = vadd.f32 0.0, %v927
      %v929 = vpop.f32.mrf.mxu0
      %v930 = vadd.f32 0.0, %v929
      %931 = vmatmul.bf16.gmra.mxu0 %v852
      %v932 = vpop.f32.mrf.mxu0
      %v933 = vadd.f32 0.0, %v932
      %v934 = vpop.f32.mrf.mxu0
      %v935 = vadd.f32 0.0, %v934
      %936 = vmatmul.bf16.gmra.mxu0 %v855
      %v937 = vpop.f32.mrf.mxu0
      %v938 = vadd.f32 0.0, %v937
      %v939 = vpop.f32.mrf.mxu0
      %v940 = vadd.f32 0.0, %v939
      %941 = vmatmul.bf16.gmra.mxu0 %v858
      %v942 = vpop.f32.mrf.mxu0
      %v943 = vadd.f32 0.0, %v942
      %v944 = vpop.f32.mrf.mxu0
      %v945 = vadd.f32 0.0, %v944
      %946 = vmatmul.bf16.gmra.mxu0 %v861
      %v947 = vpop.f32.mrf.mxu0
      %v948 = vadd.f32 0.0, %v947
      %v949 = vpop.f32.mrf.mxu0
      %v950 = vadd.f32 0.0, %v949
      %951 = vdwg.mxu0
      %v956 = vunpack.c.l.b16 %v600
      %v957 = vunpack.c.l.b16 %v601
      %v958 = vunpack.c.l.b16 %v602
      %v959 = vunpack.c.l.b16 %v603
      %v960 = vpack.c.b16 %v957, %v956
      %v961 = vpack.c.b16 %v959, %v958
      %v964 = vsel %vm814, %v566, 0
      %v966 = vsel %vm814, %v567, 0
      %v968 = vsel %vm814, %v568, 0
      %v970 = vsel %vm814, %v569, 0
      %v972 = vsel %vm814, %v570, 0
      %v974 = vsel %vm814, %v571, 0
      %v976 = vsel %vm814, %v572, 0
      %v978 = vsel %vm814, %v573, 0
      %v980 = vsel %vm814, %v574, 0
      %v982 = vsel %vm814, %v575, 0
      %v984 = vsel %vm814, %v576, 0
      %v986 = vsel %vm814, %v577, 0
      %v988 = vsel %vm814, %v578, 0
      %v990 = vsel %vm814, %v579, 0
      %v992 = vsel %vm814, %v580, 0
      %v994 = vsel %vm814, %v581, 0
      %996 = vmatpush.bf16.msra.mxu0 0
      %997 = vmatpush.bf16.msra.mxu0 0
      %998 = vmatpush.bf16.msra.mxu0 0
      %999 = vmatpush.bf16.msra.mxu0 0
      %1000 = vmatpush.bf16.msra.mxu0 0
      %1001 = vmatpush.bf16.msra.mxu0 0
      %1002 = vmatpush.bf16.msra.mxu0 %v961
      %1003 = vmatpush.bf16.msra.mxu0 %v960
      %1004 = vmatmul.bf16.gmra.mxu0 %v964
      %v1005 = vpop.f32.mrf.mxu0
      %v1006 = vadd.f32 %v873, %v1005
      %v1007 = vpop.f32.mrf.mxu0
      %v1008 = vadd.f32 %v875, %v1007
      %1009 = vmatmul.bf16.gmra.mxu0 %v966
      %v1010 = vpop.f32.mrf.mxu0
      %v1011 = vadd.f32 %v878, %v1010
      %v1012 = vpop.f32.mrf.mxu0
      %v1013 = vadd.f32 %v880, %v1012
      %1014 = vmatmul.bf16.gmra.mxu0 %v968
      %v1015 = vpop.f32.mrf.mxu0
      %v1016 = vadd.f32 %v883, %v1015
      %v1017 = vpop.f32.mrf.mxu0
      %v1018 = vadd.f32 %v885, %v1017
      %1019 = vmatmul.bf16.gmra.mxu0 %v970
      %v1020 = vpop.f32.mrf.mxu0
      %v1021 = vadd.f32 %v888, %v1020
      %v1022 = vpop.f32.mrf.mxu0
      %v1023 = vadd.f32 %v890, %v1022
      %1024 = vmatmul.bf16.gmra.mxu0 %v972
      %v1025 = vpop.f32.mrf.mxu0
      %v1026 = vadd.f32 %v893, %v1025
      %v1027 = vpop.f32.mrf.mxu0
      %v1028 = vadd.f32 %v895, %v1027
      %1029 = vmatmul.bf16.gmra.mxu0 %v974
      %v1030 = vpop.f32.mrf.mxu0
      %v1031 = vadd.f32 %v898, %v1030
      %v1032 = vpop.f32.mrf.mxu0
      %v1033 = vadd.f32 %v900, %v1032
      %1034 = vmatmul.bf16.gmra.mxu0 %v976
      %v1035 = vpop.f32.mrf.mxu0
      %v1036 = vadd.f32 %v903, %v1035
      %v1037 = vpop.f32.mrf.mxu0
      %v1038 = vadd.f32 %v905, %v1037
      %1039 = vmatmul.bf16.gmra.mxu0 %v978
      %v1040 = vpop.f32.mrf.mxu0
      %v1041 = vadd.f32 %v908, %v1040
      %v1042 = vpop.f32.mrf.mxu0
      %v1043 = vadd.f32 %v910, %v1042
      %1044 = vmatmul.bf16.gmra.mxu0 %v980
      %v1045 = vpop.f32.mrf.mxu0
      %v1046 = vadd.f32 %v913, %v1045
      %v1047 = vpop.f32.mrf.mxu0
      %v1048 = vadd.f32 %v915, %v1047
      %1049 = vmatmul.bf16.gmra.mxu0 %v982
      %v1050 = vpop.f32.mrf.mxu0
      %v1051 = vadd.f32 %v918, %v1050
      %v1052 = vpop.f32.mrf.mxu0
      %v1053 = vadd.f32 %v920, %v1052
      %1054 = vmatmul.bf16.gmra.mxu0 %v984
      %v1055 = vpop.f32.mrf.mxu0
      %v1056 = vadd.f32 %v923, %v1055
      %v1057 = vpop.f32.mrf.mxu0
      %v1058 = vadd.f32 %v925, %v1057
      %1059 = vmatmul.bf16.gmra.mxu0 %v986
      %v1060 = vpop.f32.mrf.mxu0
      %v1061 = vadd.f32 %v928, %v1060
      %v1062 = vpop.f32.mrf.mxu0
      %v1063 = vadd.f32 %v930, %v1062
      %1064 = vmatmul.bf16.gmra.mxu0 %v988
      %v1065 = vpop.f32.mrf.mxu0
      %v1066 = vadd.f32 %v933, %v1065
      %v1067 = vpop.f32.mrf.mxu0
      %v1068 = vadd.f32 %v935, %v1067
      %1069 = vmatmul.bf16.gmra.mxu0 %v990
      %v1070 = vpop.f32.mrf.mxu0
      %v1071 = vadd.f32 %v938, %v1070
      %v1072 = vpop.f32.mrf.mxu0
      %v1073 = vadd.f32 %v940, %v1072
      %1074 = vmatmul.bf16.gmra.mxu0 %v992
      %v1075 = vpop.f32.mrf.mxu0
      %v1076 = vadd.f32 %v943, %v1075
      %v1077 = vpop.f32.mrf.mxu0
      %v1078 = vadd.f32 %v945, %v1077
      %1079 = vmatmul.bf16.gmra.mxu0 %v994
      %v1080 = vpop.f32.mrf.mxu0
      %v1081 = vadd.f32 %v948, %v1080
      %v1082 = vpop.f32.mrf.mxu0
      %v1083 = vadd.f32 %v950, %v1082
      %1084 = vdwg.mxu0
      %s1085 = scalar_lea.vmem %s281, 32
      %v1086 = vld [vmem:[%s1085] sm:$0xf]
      %v1087 = vld [vmem:[%s1085 + $0x4] sm:$0xf]
      %v1088 = vld [vmem:[%s1085 + $0x8] sm:$0xf]
      %v1089 = vld [vmem:[%s1085 + $0xc] sm:$0xf]
      %vm1122 = vcmask 1046528
      %v1123 = vrot.slane %v566, 1
      %v1124 = vrot.slane %v583, 1
      %v1125 = vsel %vm1122, %v1123, %v1124
      %v1126 = vrot.slane %v567, 1
      %v1127 = vrot.slane %v584, 1
      %v1128 = vsel %vm1122, %v1126, %v1127
      %v1129 = vrot.slane %v568, 1
      %v1130 = vrot.slane %v585, 1
      %v1131 = vsel %vm1122, %v1129, %v1130
      %v1132 = vrot.slane %v569, 1
      %v1133 = vrot.slane %v586, 1
      %v1134 = vsel %vm1122, %v1132, %v1133
      %v1135 = vrot.slane %v570, 1
      %v1136 = vrot.slane %v587, 1
      %v1137 = vsel %vm1122, %v1135, %v1136
      %v1138 = vrot.slane %v571, 1
      %v1139 = vrot.slane %v588, 1
      %v1140 = vsel %vm1122, %v1138, %v1139
      %v1141 = vrot.slane %v572, 1
      %v1142 = vrot.slane %v589, 1
      %v1143 = vsel %vm1122, %v1141, %v1142
      %v1144 = vrot.slane %v573, 1
      %v1145 = vrot.slane %v590, 1
      %v1146 = vsel %vm1122, %v1144, %v1145
      %v1147 = vrot.slane %v574, 1
      %v1148 = vrot.slane %v591, 1
      %v1149 = vsel %vm1122, %v1147, %v1148
      %v1150 = vrot.slane %v575, 1
      %v1151 = vrot.slane %v592, 1
      %v1152 = vsel %vm1122, %v1150, %v1151
      %v1153 = vrot.slane %v576, 1
      %v1154 = vrot.slane %v593, 1
      %v1155 = vsel %vm1122, %v1153, %v1154
      %v1156 = vrot.slane %v577, 1
      %v1157 = vrot.slane %v594, 1
      %v1158 = vsel %vm1122, %v1156, %v1157
      %v1159 = vrot.slane %v578, 1
      %v1160 = vrot.slane %v595, 1
      %v1161 = vsel %vm1122, %v1159, %v1160
      %v1162 = vrot.slane %v579, 1
      %v1163 = vrot.slane %v596, 1
      %v1164 = vsel %vm1122, %v1162, %v1163
      %v1165 = vrot.slane %v580, 1
      %v1166 = vrot.slane %v597, 1
      %v1167 = vsel %vm1122, %v1165, %v1166
      %v1168 = vrot.slane %v581, 1
      %v1169 = vrot.slane %v598, 1
      %v1170 = vsel %vm1122, %v1168, %v1169
      %v1175 = vunpack.c.l.b16 %v1086
      %v1176 = vunpack.c.l.b16 %v1087
      %v1177 = vunpack.c.l.b16 %v1088
      %v1178 = vunpack.c.l.b16 %v1089
      %v1179 = vpack.c.b16 %v1176, %v1175
      %v1180 = vpack.c.b16 %v1178, %v1177
      %v1184 = vsel %vm814, %v1125, 0
      %v1187 = vsel %vm814, %v1128, 0
      %v1190 = vsel %vm814, %v1131, 0
      %v1193 = vsel %vm814, %v1134, 0
      %v1196 = vsel %vm814, %v1137, 0
      %v1199 = vsel %vm814, %v1140, 0
      %v1202 = vsel %vm814, %v1143, 0
      %v1205 = vsel %vm814, %v1146, 0
      %v1208 = vsel %vm814, %v1149, 0
      %v1211 = vsel %vm814, %v1152, 0
      %v1214 = vsel %vm814, %v1155, 0
      %v1217 = vsel %vm814, %v1158, 0
      %v1220 = vsel %vm814, %v1161, 0
      %v1223 = vsel %vm814, %v1164, 0
      %v1226 = vsel %vm814, %v1167, 0
      %v1229 = vsel %vm814, %v1170, 0
      %1231 = vmatpush.bf16.msra.mxu0 0
      %1232 = vmatpush.bf16.msra.mxu0 0
      %1233 = vmatpush.bf16.msra.mxu0 0
      %1234 = vmatpush.bf16.msra.mxu0 0
      %1235 = vmatpush.bf16.msra.mxu0 0
      %1236 = vmatpush.bf16.msra.mxu0 0
      %1237 = vmatpush.bf16.msra.mxu0 %v1180
      %1238 = vmatpush.bf16.msra.mxu0 %v1179
      %1239 = vmatmul.bf16.gmra.mxu0 %v1184
      %v1240 = vpop.f32.mrf.mxu0
      %v1241 = vadd.f32 0.0, %v1240
      %v1242 = vpop.f32.mrf.mxu0
      %v1243 = vadd.f32 0.0, %v1242
      %1244 = vmatmul.bf16.gmra.mxu0 %v1187
      %v1245 = vpop.f32.mrf.mxu0
      %v1246 = vadd.f32 0.0, %v1245
      %v1247 = vpop.f32.mrf.mxu0
      %v1248 = vadd.f32 0.0, %v1247
      %1249 = vmatmul.bf16.gmra.mxu0 %v1190
      %v1250 = vpop.f32.mrf.mxu0
      %v1251 = vadd.f32 0.0, %v1250
      %v1252 = vpop.f32.mrf.mxu0
      %v1253 = vadd.f32 0.0, %v1252
      %1254 = vmatmul.bf16.gmra.mxu0 %v1193
      %v1255 = vpop.f32.mrf.mxu0
      %v1256 = vadd.f32 0.0, %v1255
      %v1257 = vpop.f32.mrf.mxu0
      %v1258 = vadd.f32 0.0, %v1257
      %1259 = vmatmul.bf16.gmra.mxu0 %v1196
      %v1260 = vpop.f32.mrf.mxu0
      %v1261 = vadd.f32 0.0, %v1260
      %v1262 = vpop.f32.mrf.mxu0
      %v1263 = vadd.f32 0.0, %v1262
      %1264 = vmatmul.bf16.gmra.mxu0 %v1199
      %v1265 = vpop.f32.mrf.mxu0
      %v1266 = vadd.f32 0.0, %v1265
      %v1267 = vpop.f32.mrf.mxu0
      %v1268 = vadd.f32 0.0, %v1267
      %1269 = vmatmul.bf16.gmra.mxu0 %v1202
      %v1270 = vpop.f32.mrf.mxu0
      %v1271 = vadd.f32 0.0, %v1270
      %v1272 = vpop.f32.mrf.mxu0
      %v1273 = vadd.f32 0.0, %v1272
      %1274 = vmatmul.bf16.gmra.mxu0 %v1205
      %v1275 = vpop.f32.mrf.mxu0
      %v1276 = vadd.f32 0.0, %v1275
      %v1277 = vpop.f32.mrf.mxu0
      %v1278 = vadd.f32 0.0, %v1277
      %1279 = vmatmul.bf16.gmra.mxu0 %v1208
      %v1280 = vpop.f32.mrf.mxu0
      %v1281 = vadd.f32 0.0, %v1280
      %v1282 = vpop.f32.mrf.mxu0
      %v1283 = vadd.f32 0.0, %v1282
      %1284 = vmatmul.bf16.gmra.mxu0 %v1211
      %v1285 = vpop.f32.mrf.mxu0
      %v1286 = vadd.f32 0.0, %v1285
      %v1287 = vpop.f32.mrf.mxu0
      %v1288 = vadd.f32 0.0, %v1287
      %1289 = vmatmul.bf16.gmra.mxu0 %v1214
      %v1290 = vpop.f32.mrf.mxu0
      %v1291 = vadd.f32 0.0, %v1290
      %v1292 = vpop.f32.mrf.mxu0
      %v1293 = vadd.f32 0.0, %v1292
      %1294 = vmatmul.bf16.gmra.mxu0 %v1217
      %v1295 = vpop.f32.mrf.mxu0
      %v1296 = vadd.f32 0.0, %v1295
      %v1297 = vpop.f32.mrf.mxu0
      %v1298 = vadd.f32 0.0, %v1297
      %1299 = vmatmul.bf16.gmra.mxu0 %v1220
      %v1300 = vpop.f32.mrf.mxu0
      %v1301 = vadd.f32 0.0, %v1300
      %v1302 = vpop.f32.mrf.mxu0
      %v1303 = vadd.f32 0.0, %v1302
      %1304 = vmatmul.bf16.gmra.mxu0 %v1223
      %v1305 = vpop.f32.mrf.mxu0
      %v1306 = vadd.f32 0.0, %v1305
      %v1307 = vpop.f32.mrf.mxu0
      %v1308 = vadd.f32 0.0, %v1307
      %1309 = vmatmul.bf16.gmra.mxu0 %v1226
      %v1310 = vpop.f32.mrf.mxu0
      %v1311 = vadd.f32 0.0, %v1310
      %v1312 = vpop.f32.mrf.mxu0
      %v1313 = vadd.f32 0.0, %v1312
      %1314 = vmatmul.bf16.gmra.mxu0 %v1229
      %v1315 = vpop.f32.mrf.mxu0
      %v1316 = vadd.f32 0.0, %v1315
      %v1317 = vpop.f32.mrf.mxu0
      %v1318 = vadd.f32 0.0, %v1317
      %1319 = vdwg.mxu0
      %v1320 = vadd.f32 %v1006, %v1241
      %v1321 = vadd.f32 %v1008, %v1243
      %v1322 = vadd.f32 %v1011, %v1246
      %v1323 = vadd.f32 %v1013, %v1248
      %v1324 = vadd.f32 %v1016, %v1251
      %v1325 = vadd.f32 %v1018, %v1253
      %v1326 = vadd.f32 %v1021, %v1256
      %v1327 = vadd.f32 %v1023, %v1258
      %v1328 = vadd.f32 %v1026, %v1261
      %v1329 = vadd.f32 %v1028, %v1263
      %v1330 = vadd.f32 %v1031, %v1266
      %v1331 = vadd.f32 %v1033, %v1268
      %v1332 = vadd.f32 %v1036, %v1271
      %v1333 = vadd.f32 %v1038, %v1273
      %v1334 = vadd.f32 %v1041, %v1276
      %v1335 = vadd.f32 %v1043, %v1278
      %v1336 = vadd.f32 %v1046, %v1281
      %v1337 = vadd.f32 %v1048, %v1283
      %v1338 = vadd.f32 %v1051, %v1286
      %v1339 = vadd.f32 %v1053, %v1288
      %v1340 = vadd.f32 %v1056, %v1291
      %v1341 = vadd.f32 %v1058, %v1293
      %v1342 = vadd.f32 %v1061, %v1296
      %v1343 = vadd.f32 %v1063, %v1298
      %v1344 = vadd.f32 %v1066, %v1301
      %v1345 = vadd.f32 %v1068, %v1303
      %v1346 = vadd.f32 %v1071, %v1306
      %v1347 = vadd.f32 %v1073, %v1308
      %v1348 = vadd.f32 %v1076, %v1311
      %v1349 = vadd.f32 %v1078, %v1313
      %v1350 = vadd.f32 %v1081, %v1316
      %v1351 = vadd.f32 %v1083, %v1318
      %s1352 = scalar_lea.vmem %s281, 48
      %v1353 = vld [vmem:[%s1352] sm:$0xf]
      %v1354 = vld [vmem:[%s1352 + $0x4] sm:$0xf]
      %v1355 = vld [vmem:[%s1352 + $0x8] sm:$0xf]
      %v1356 = vld [vmem:[%s1352 + $0xc] sm:$0xf]
      %v1361 = vunpack.c.l.b16 %v1353
      %v1362 = vunpack.c.l.b16 %v1354
      %v1363 = vunpack.c.l.b16 %v1355
      %v1364 = vunpack.c.l.b16 %v1356
      %v1365 = vpack.c.b16 %v1362, %v1361
      %v1366 = vpack.c.b16 %v1364, %v1363
      %v1370 = vsel %vm814, %v582, 0
      %1372 = vmatpush.bf16.msra.mxu0 0
      %1373 = vmatpush.bf16.msra.mxu0 0
      %1374 = vmatpush.bf16.msra.mxu0 0
      %1375 = vmatpush.bf16.msra.mxu0 0
      %1376 = vmatpush.bf16.msra.mxu0 0
      %1377 = vmatpush.bf16.msra.mxu0 0
      %1378 = vmatpush.bf16.msra.mxu0 %v1366
      %1379 = vmatpush.bf16.msra.mxu0 %v1365
      %1380 = vmatmul.bf16.gmra.mxu0 %v966
      %v1381 = vpop.f32.mrf.mxu0
      %v1382 = vadd.f32 0.0, %v1381
      %v1383 = vpop.f32.mrf.mxu0
      %v1384 = vadd.f32 0.0, %v1383
      %1385 = vmatmul.bf16.gmra.mxu0 %v968
      %v1386 = vpop.f32.mrf.mxu0
      %v1387 = vadd.f32 0.0, %v1386
      %v1388 = vpop.f32.mrf.mxu0
      %v1389 = vadd.f32 0.0, %v1388
      %1390 = vmatmul.bf16.gmra.mxu0 %v970
      %v1391 = vpop.f32.mrf.mxu0
      %v1392 = vadd.f32 0.0, %v1391
      %v1393 = vpop.f32.mrf.mxu0
      %v1394 = vadd.f32 0.0, %v1393
      %1395 = vmatmul.bf16.gmra.mxu0 %v972
      %v1396 = vpop.f32.mrf.mxu0
      %v1397 = vadd.f32 0.0, %v1396
      %v1398 = vpop.f32.mrf.mxu0
      %v1399 = vadd.f32 0.0, %v1398
      %1400 = vmatmul.bf16.gmra.mxu0 %v974
      %v1401 = vpop.f32.mrf.mxu0
      %v1402 = vadd.f32 0.0, %v1401
      %v1403 = vpop.f32.mrf.mxu0
      %v1404 = vadd.f32 0.0, %v1403
      %1405 = vmatmul.bf16.gmra.mxu0 %v976
      %v1406 = vpop.f32.mrf.mxu0
      %v1407 = vadd.f32 0.0, %v1406
      %v1408 = vpop.f32.mrf.mxu0
      %v1409 = vadd.f32 0.0, %v1408
      %1410 = vmatmul.bf16.gmra.mxu0 %v978
      %v1411 = vpop.f32.mrf.mxu0
      %v1412 = vadd.f32 0.0, %v1411
      %v1413 = vpop.f32.mrf.mxu0
      %v1414 = vadd.f32 0.0, %v1413
      %1415 = vmatmul.bf16.gmra.mxu0 %v980
      %v1416 = vpop.f32.mrf.mxu0
      %v1417 = vadd.f32 0.0, %v1416
      %v1418 = vpop.f32.mrf.mxu0
      %v1419 = vadd.f32 0.0, %v1418
      %1420 = vmatmul.bf16.gmra.mxu0 %v982
      %v1421 = vpop.f32.mrf.mxu0
      %v1422 = vadd.f32 0.0, %v1421
      %v1423 = vpop.f32.mrf.mxu0
      %v1424 = vadd.f32 0.0, %v1423
      %1425 = vmatmul.bf16.gmra.mxu0 %v984
      %v1426 = vpop.f32.mrf.mxu0
      %v1427 = vadd.f32 0.0, %v1426
      %v1428 = vpop.f32.mrf.mxu0
      %v1429 = vadd.f32 0.0, %v1428
      %1430 = vmatmul.bf16.gmra.mxu0 %v986
      %v1431 = vpop.f32.mrf.mxu0
      %v1432 = vadd.f32 0.0, %v1431
      %v1433 = vpop.f32.mrf.mxu0
      %v1434 = vadd.f32 0.0, %v1433
      %1435 = vmatmul.bf16.gmra.mxu0 %v988
      %v1436 = vpop.f32.mrf.mxu0
      %v1437 = vadd.f32 0.0, %v1436
      %v1438 = vpop.f32.mrf.mxu0
      %v1439 = vadd.f32 0.0, %v1438
      %1440 = vmatmul.bf16.gmra.mxu0 %v990
      %v1441 = vpop.f32.mrf.mxu0
      %v1442 = vadd.f32 0.0, %v1441
      %v1443 = vpop.f32.mrf.mxu0
      %v1444 = vadd.f32 0.0, %v1443
      %1445 = vmatmul.bf16.gmra.mxu0 %v992
      %v1446 = vpop.f32.mrf.mxu0
      %v1447 = vadd.f32 0.0, %v1446
      %v1448 = vpop.f32.mrf.mxu0
      %v1449 = vadd.f32 0.0, %v1448
      %1450 = vmatmul.bf16.gmra.mxu0 %v994
      %v1451 = vpop.f32.mrf.mxu0
      %v1452 = vadd.f32 0.0, %v1451
      %v1453 = vpop.f32.mrf.mxu0
      %v1454 = vadd.f32 0.0, %v1453
      %1455 = vmatmul.bf16.gmra.mxu0 %v1370
      %v1456 = vpop.f32.mrf.mxu0
      %v1457 = vadd.f32 0.0, %v1456
      %v1458 = vpop.f32.mrf.mxu0
      %v1459 = vadd.f32 0.0, %v1458
      %1460 = vdwg.mxu0
      %v1461 = vadd.f32 %v1320, %v1382
      %v1462 = vadd.f32 %v1321, %v1384
      %v1463 = vadd.f32 %v1322, %v1387
      %v1464 = vadd.f32 %v1323, %v1389
      %v1465 = vadd.f32 %v1324, %v1392
      %v1466 = vadd.f32 %v1325, %v1394
      %v1467 = vadd.f32 %v1326, %v1397
      %v1468 = vadd.f32 %v1327, %v1399
      %v1469 = vadd.f32 %v1328, %v1402
      %v1470 = vadd.f32 %v1329, %v1404
      %v1471 = vadd.f32 %v1330, %v1407
      %v1472 = vadd.f32 %v1331, %v1409
      %v1473 = vadd.f32 %v1332, %v1412
      %v1474 = vadd.f32 %v1333, %v1414
      %v1475 = vadd.f32 %v1334, %v1417
      %v1476 = vadd.f32 %v1335, %v1419
      %v1477 = vadd.f32 %v1336, %v1422
      %v1478 = vadd.f32 %v1337, %v1424
      %v1479 = vadd.f32 %v1338, %v1427
      %v1480 = vadd.f32 %v1339, %v1429
      %v1481 = vadd.f32 %v1340, %v1432
      %v1482 = vadd.f32 %v1341, %v1434
      %v1483 = vadd.f32 %v1342, %v1437
      %v1484 = vadd.f32 %v1343, %v1439
      %v1485 = vadd.f32 %v1344, %v1442
      %v1486 = vadd.f32 %v1345, %v1444
      %v1487 = vadd.f32 %v1346, %v1447
      %v1488 = vadd.f32 %v1347, %v1449
      %v1489 = vadd.f32 %v1348, %v1452
      %v1490 = vadd.f32 %v1349, %v1454
      %v1491 = vadd.f32 %v1350, %v1457
      %v1492 = vadd.f32 %v1351, %v1459
      %s1493 = scalar_lea.vmem %s281, 64
      %v1494 = vld [vmem:[%s1493] sm:$0xf]
      %v1495 = vld [vmem:[%s1493 + $0x4] sm:$0xf]
      %v1496 = vld [vmem:[%s1493 + $0x8] sm:$0xf]
      %v1497 = vld [vmem:[%s1493 + $0xc] sm:$0xf]
      %v1498 = vshrl.u32 %v582, 16
      %v1500 = vshll.u32 %v582, 16
      %v1502 = vrot.slane %v1500, 1
      %v1503 = vor.u32 %v1498, %v1502
      %v1505 = vshll.u32 %v599, 16
      %v1507 = vrot.slane %v1505, 1
      %v1508 = vsel %vm609, %v1503, %v1507
      %v1513 = vunpack.c.l.b16 %v1494
      %v1514 = vunpack.c.l.b16 %v1495
      %v1515 = vunpack.c.l.b16 %v1496
      %v1516 = vunpack.c.l.b16 %v1497
      %v1517 = vpack.c.b16 %v1514, %v1513
      %v1518 = vpack.c.b16 %v1516, %v1515
      %v1522 = vsel %vm814, %v1508, 0
      %1524 = vmatpush.bf16.msra.mxu0 0
      %1525 = vmatpush.bf16.msra.mxu0 0
      %1526 = vmatpush.bf16.msra.mxu0 0
      %1527 = vmatpush.bf16.msra.mxu0 0
      %1528 = vmatpush.bf16.msra.mxu0 0
      %1529 = vmatpush.bf16.msra.mxu0 0
      %1530 = vmatpush.bf16.msra.mxu0 %v1518
      %1531 = vmatpush.bf16.msra.mxu0 %v1517
      %1532 = vmatmul.bf16.gmra.mxu0 %v819
      %v1533 = vpop.f32.mrf.mxu0
      %v1534 = vadd.f32 0.0, %v1533
      %v1535 = vpop.f32.mrf.mxu0
      %v1536 = vadd.f32 0.0, %v1535
      %1537 = vmatmul.bf16.gmra.mxu0 %v822
      %v1538 = vpop.f32.mrf.mxu0
      %v1539 = vadd.f32 0.0, %v1538
      %v1540 = vpop.f32.mrf.mxu0
      %v1541 = vadd.f32 0.0, %v1540
      %1542 = vmatmul.bf16.gmra.mxu0 %v825
      %v1543 = vpop.f32.mrf.mxu0
      %v1544 = vadd.f32 0.0, %v1543
      %v1545 = vpop.f32.mrf.mxu0
      %v1546 = vadd.f32 0.0, %v1545
      %1547 = vmatmul.bf16.gmra.mxu0 %v828
      %v1548 = vpop.f32.mrf.mxu0
      %v1549 = vadd.f32 0.0, %v1548
      %v1550 = vpop.f32.mrf.mxu0
      %v1551 = vadd.f32 0.0, %v1550
      %1552 = vmatmul.bf16.gmra.mxu0 %v831
      %v1553 = vpop.f32.mrf.mxu0
      %v1554 = vadd.f32 0.0, %v1553
      %v1555 = vpop.f32.mrf.mxu0
      %v1556 = vadd.f32 0.0, %v1555
      %1557 = vmatmul.bf16.gmra.mxu0 %v834
      %v1558 = vpop.f32.mrf.mxu0
      %v1559 = vadd.f32 0.0, %v1558
      %v1560 = vpop.f32.mrf.mxu0
      %v1561 = vadd.f32 0.0, %v1560
      %1562 = vmatmul.bf16.gmra.mxu0 %v837
      %v1563 = vpop.f32.mrf.mxu0
      %v1564 = vadd.f32 0.0, %v1563
      %v1565 = vpop.f32.mrf.mxu0
      %v1566 = vadd.f32 0.0, %v1565
      %1567 = vmatmul.bf16.gmra.mxu0 %v840
      %v1568 = vpop.f32.mrf.mxu0
      %v1569 = vadd.f32 0.0, %v1568
      %v1570 = vpop.f32.mrf.mxu0
      %v1571 = vadd.f32 0.0, %v1570
      %1572 = vmatmul.bf16.gmra.mxu0 %v843
      %v1573 = vpop.f32.mrf.mxu0
      %v1574 = vadd.f32 0.0, %v1573
      %v1575 = vpop.f32.mrf.mxu0
      %v1576 = vadd.f32 0.0, %v1575
      %1577 = vmatmul.bf16.gmra.mxu0 %v846
      %v1578 = vpop.f32.mrf.mxu0
      %v1579 = vadd.f32 0.0, %v1578
      %v1580 = vpop.f32.mrf.mxu0
      %v1581 = vadd.f32 0.0, %v1580
      %1582 = vmatmul.bf16.gmra.mxu0 %v849
      %v1583 = vpop.f32.mrf.mxu0
      %v1584 = vadd.f32 0.0, %v1583
      %v1585 = vpop.f32.mrf.mxu0
      %v1586 = vadd.f32 0.0, %v1585
      %1587 = vmatmul.bf16.gmra.mxu0 %v852
      %v1588 = vpop.f32.mrf.mxu0
      %v1589 = vadd.f32 0.0, %v1588
      %v1590 = vpop.f32.mrf.mxu0
      %v1591 = vadd.f32 0.0, %v1590
      %1592 = vmatmul.bf16.gmra.mxu0 %v855
      %v1593 = vpop.f32.mrf.mxu0
      %v1594 = vadd.f32 0.0, %v1593
      %v1595 = vpop.f32.mrf.mxu0
      %v1596 = vadd.f32 0.0, %v1595
      %1597 = vmatmul.bf16.gmra.mxu0 %v858
      %v1598 = vpop.f32.mrf.mxu0
      %v1599 = vadd.f32 0.0, %v1598
      %v1600 = vpop.f32.mrf.mxu0
      %v1601 = vadd.f32 0.0, %v1600
      %1602 = vmatmul.bf16.gmra.mxu0 %v861
      %v1603 = vpop.f32.mrf.mxu0
      %v1604 = vadd.f32 0.0, %v1603
      %v1605 = vpop.f32.mrf.mxu0
      %v1606 = vadd.f32 0.0, %v1605
      %1607 = vmatmul.bf16.gmra.mxu0 %v1522
      %v1608 = vpop.f32.mrf.mxu0
      %v1609 = vadd.f32 0.0, %v1608
      %v1610 = vpop.f32.mrf.mxu0
      %v1611 = vadd.f32 0.0, %v1610
      %1612 = vdwg.mxu0
      %v1613 = vadd.f32 %v1461, %v1534
      %v1614 = vadd.f32 %v1462, %v1536
      %v1615 = vadd.f32 %v1463, %v1539
      %v1616 = vadd.f32 %v1464, %v1541
      %v1617 = vadd.f32 %v1465, %v1544
      %v1618 = vadd.f32 %v1466, %v1546
      %v1619 = vadd.f32 %v1467, %v1549
      %v1620 = vadd.f32 %v1468, %v1551
      %v1621 = vadd.f32 %v1469, %v1554
      %v1622 = vadd.f32 %v1470, %v1556
      %v1623 = vadd.f32 %v1471, %v1559
      %v1624 = vadd.f32 %v1472, %v1561
      %v1625 = vadd.f32 %v1473, %v1564
      %v1626 = vadd.f32 %v1474, %v1566
      %v1627 = vadd.f32 %v1475, %v1569
      %v1628 = vadd.f32 %v1476, %v1571
      %v1629 = vadd.f32 %v1477, %v1574
      %v1630 = vadd.f32 %v1478, %v1576
      %v1631 = vadd.f32 %v1479, %v1579
      %v1632 = vadd.f32 %v1480, %v1581
      %v1633 = vadd.f32 %v1481, %v1584
      %v1634 = vadd.f32 %v1482, %v1586
      %v1635 = vadd.f32 %v1483, %v1589
      %v1636 = vadd.f32 %v1484, %v1591
      %v1637 = vadd.f32 %v1485, %v1594
      %v1638 = vadd.f32 %v1486, %v1596
      %v1639 = vadd.f32 %v1487, %v1599
      %v1640 = vadd.f32 %v1488, %v1601
      %v1641 = vadd.f32 %v1489, %v1604
      %v1642 = vadd.f32 %v1490, %v1606
      %v1643 = vadd.f32 %v1491, %v1609
      %v1644 = vadd.f32 %v1492, %v1611
      %s1645 = scalar_lea.vmem %s281, 80
      %v1646 = vld [vmem:[%s1645] sm:$0xf]
      %v1647 = vld [vmem:[%s1645 + $0x4] sm:$0xf]
      %v1648 = vld [vmem:[%s1645 + $0x8] sm:$0xf]
      %v1649 = vld [vmem:[%s1645 + $0xc] sm:$0xf]
      %v1652 = vrot.slane %v582, 1
      %v1653 = vrot.slane %v599, 1
      %v1654 = vsel %vm1122, %v1652, %v1653
      %v1659 = vunpack.c.l.b16 %v1646
      %v1660 = vunpack.c.l.b16 %v1647
      %v1661 = vunpack.c.l.b16 %v1648
      %v1662 = vunpack.c.l.b16 %v1649
      %v1663 = vpack.c.b16 %v1660, %v1659
      %v1664 = vpack.c.b16 %v1662, %v1661
      %v1668 = vsel %vm814, %v1654, 0
      %1670 = vmatpush.bf16.msra.mxu0 0
      %1671 = vmatpush.bf16.msra.mxu0 0
      %1672 = vmatpush.bf16.msra.mxu0 0
      %1673 = vmatpush.bf16.msra.mxu0 0
      %1674 = vmatpush.bf16.msra.mxu0 0
      %1675 = vmatpush.bf16.msra.mxu0 0
      %1676 = vmatpush.bf16.msra.mxu0 %v1664
      %1677 = vmatpush.bf16.msra.mxu0 %v1663
      %1678 = vmatmul.bf16.gmra.mxu0 %v1187
      %v1679 = vpop.f32.mrf.mxu0
      %v1680 = vadd.f32 0.0, %v1679
      %v1681 = vpop.f32.mrf.mxu0
      %v1682 = vadd.f32 0.0, %v1681
      %1683 = vmatmul.bf16.gmra.mxu0 %v1190
      %v1684 = vpop.f32.mrf.mxu0
      %v1685 = vadd.f32 0.0, %v1684
      %v1686 = vpop.f32.mrf.mxu0
      %v1687 = vadd.f32 0.0, %v1686
      %1688 = vmatmul.bf16.gmra.mxu0 %v1193
      %v1689 = vpop.f32.mrf.mxu0
      %v1690 = vadd.f32 0.0, %v1689
      %v1691 = vpop.f32.mrf.mxu0
      %v1692 = vadd.f32 0.0, %v1691
      %1693 = vmatmul.bf16.gmra.mxu0 %v1196
      %v1694 = vpop.f32.mrf.mxu0
      %v1695 = vadd.f32 0.0, %v1694
      %v1696 = vpop.f32.mrf.mxu0
      %v1697 = vadd.f32 0.0, %v1696
      %1698 = vmatmul.bf16.gmra.mxu0 %v1199
      %v1699 = vpop.f32.mrf.mxu0
      %v1700 = vadd.f32 0.0, %v1699
      %v1701 = vpop.f32.mrf.mxu0
      %v1702 = vadd.f32 0.0, %v1701
      %1703 = vmatmul.bf16.gmra.mxu0 %v1202
      %v1704 = vpop.f32.mrf.mxu0
      %v1705 = vadd.f32 0.0, %v1704
      %v1706 = vpop.f32.mrf.mxu0
      %v1707 = vadd.f32 0.0, %v1706
      %1708 = vmatmul.bf16.gmra.mxu0 %v1205
      %v1709 = vpop.f32.mrf.mxu0
      %v1710 = vadd.f32 0.0, %v1709
      %v1711 = vpop.f32.mrf.mxu0
      %v1712 = vadd.f32 0.0, %v1711
      %1713 = vmatmul.bf16.gmra.mxu0 %v1208
      %v1714 = vpop.f32.mrf.mxu0
      %v1715 = vadd.f32 0.0, %v1714
      %v1716 = vpop.f32.mrf.mxu0
      %v1717 = vadd.f32 0.0, %v1716
      %1718 = vmatmul.bf16.gmra.mxu0 %v1211
      %v1719 = vpop.f32.mrf.mxu0
      %v1720 = vadd.f32 0.0, %v1719
      %v1721 = vpop.f32.mrf.mxu0
      %v1722 = vadd.f32 0.0, %v1721
      %1723 = vmatmul.bf16.gmra.mxu0 %v1214
      %v1724 = vpop.f32.mrf.mxu0
      %v1725 = vadd.f32 0.0, %v1724
      %v1726 = vpop.f32.mrf.mxu0
      %v1727 = vadd.f32 0.0, %v1726
      %1728 = vmatmul.bf16.gmra.mxu0 %v1217
      %v1729 = vpop.f32.mrf.mxu0
      %v1730 = vadd.f32 0.0, %v1729
      %v1731 = vpop.f32.mrf.mxu0
      %v1732 = vadd.f32 0.0, %v1731
      %1733 = vmatmul.bf16.gmra.mxu0 %v1220
      %v1734 = vpop.f32.mrf.mxu0
      %v1735 = vadd.f32 0.0, %v1734
      %v1736 = vpop.f32.mrf.mxu0
      %v1737 = vadd.f32 0.0, %v1736
      %1738 = vmatmul.bf16.gmra.mxu0 %v1223
      %v1739 = vpop.f32.mrf.mxu0
      %v1740 = vadd.f32 0.0, %v1739
      %v1741 = vpop.f32.mrf.mxu0
      %v1742 = vadd.f32 0.0, %v1741
      %1743 = vmatmul.bf16.gmra.mxu0 %v1226
      %v1744 = vpop.f32.mrf.mxu0
      %v1745 = vadd.f32 0.0, %v1744
      %v1746 = vpop.f32.mrf.mxu0
      %v1747 = vadd.f32 0.0, %v1746
      %1748 = vmatmul.bf16.gmra.mxu0 %v1229
      %v1749 = vpop.f32.mrf.mxu0
      %v1750 = vadd.f32 0.0, %v1749
      %v1751 = vpop.f32.mrf.mxu0
      %v1752 = vadd.f32 0.0, %v1751
      %1753 = vmatmul.bf16.gmra.mxu0 %v1668
      %v1754 = vpop.f32.mrf.mxu0
      %v1755 = vadd.f32 0.0, %v1754
      %v1756 = vpop.f32.mrf.mxu0
      %v1757 = vadd.f32 0.0, %v1756
      %1758 = vdwg.mxu0
      %v1759 = vadd.f32 %v1613, %v1680
      %v1760 = vadd.f32 %v1614, %v1682
      %v1761 = vadd.f32 %v1615, %v1685
      %v1762 = vadd.f32 %v1616, %v1687
      %v1763 = vadd.f32 %v1617, %v1690
      %v1764 = vadd.f32 %v1618, %v1692
      %v1765 = vadd.f32 %v1619, %v1695
      %v1766 = vadd.f32 %v1620, %v1697
      %v1767 = vadd.f32 %v1621, %v1700
      %v1768 = vadd.f32 %v1622, %v1702
      %v1769 = vadd.f32 %v1623, %v1705
      %v1770 = vadd.f32 %v1624, %v1707
      %v1771 = vadd.f32 %v1625, %v1710
      %v1772 = vadd.f32 %v1626, %v1712
      %v1773 = vadd.f32 %v1627, %v1715
      %v1774 = vadd.f32 %v1628, %v1717
      %v1775 = vadd.f32 %v1629, %v1720
      %v1776 = vadd.f32 %v1630, %v1722
      %v1777 = vadd.f32 %v1631, %v1725
      %v1778 = vadd.f32 %v1632, %v1727
      %v1779 = vadd.f32 %v1633, %v1730
      %v1780 = vadd.f32 %v1634, %v1732
      %v1781 = vadd.f32 %v1635, %v1735
      %v1782 = vadd.f32 %v1636, %v1737
      %v1783 = vadd.f32 %v1637, %v1740
      %v1784 = vadd.f32 %v1638, %v1742
      %v1785 = vadd.f32 %v1639, %v1745
      %v1786 = vadd.f32 %v1640, %v1747
      %v1787 = vadd.f32 %v1641, %v1750
      %v1788 = vadd.f32 %v1642, %v1752
      %v1789 = vadd.f32 %v1643, %v1755
      %v1790 = vadd.f32 %v1644, %v1757
      %s1791 = scalar_lea.vmem %s281, 96
      %v1792 = vld [vmem:[%s1791] sm:$0xf]
      %v1793 = vld [vmem:[%s1791 + $0x4] sm:$0xf]
      %v1794 = vld [vmem:[%s1791 + $0x8] sm:$0xf]
      %v1795 = vld [vmem:[%s1791 + $0xc] sm:$0xf]
      %v1800 = vunpack.c.l.b16 %v1792
      %v1801 = vunpack.c.l.b16 %v1793
      %v1802 = vunpack.c.l.b16 %v1794
      %v1803 = vunpack.c.l.b16 %v1795
      %v1804 = vpack.c.b16 %v1801, %v1800
      %v1805 = vpack.c.b16 %v1803, %v1802
      %1808 = vmatpush.bf16.msra.mxu0 0
      %1809 = vmatpush.bf16.msra.mxu0 0
      %1810 = vmatpush.bf16.msra.mxu0 0
      %1811 = vmatpush.bf16.msra.mxu0 0
      %1812 = vmatpush.bf16.msra.mxu0 0
      %1813 = vmatpush.bf16.msra.mxu0 0
      %1814 = vmatpush.bf16.msra.mxu0 %v1805
      %1815 = vmatpush.bf16.msra.mxu0 %v1804
      %1816 = vmatmul.bf16.gmra.mxu0 %v968
      %v1817 = vpop.f32.mrf.mxu0
      %v1818 = vadd.f32 0.0, %v1817
      %v1819 = vpop.f32.mrf.mxu0
      %v1820 = vadd.f32 0.0, %v1819
      %1821 = vmatmul.bf16.gmra.mxu0 %v970
      %v1822 = vpop.f32.mrf.mxu0
      %v1823 = vadd.f32 0.0, %v1822
      %v1824 = vpop.f32.mrf.mxu0
      %v1825 = vadd.f32 0.0, %v1824
      %1826 = vmatmul.bf16.gmra.mxu0 %v972
      %v1827 = vpop.f32.mrf.mxu0
      %v1828 = vadd.f32 0.0, %v1827
      %v1829 = vpop.f32.mrf.mxu0
      %v1830 = vadd.f32 0.0, %v1829
      %1831 = vmatmul.bf16.gmra.mxu0 %v974
      %v1832 = vpop.f32.mrf.mxu0
      %v1833 = vadd.f32 0.0, %v1832
      %v1834 = vpop.f32.mrf.mxu0
      %v1835 = vadd.f32 0.0, %v1834
      %1836 = vmatmul.bf16.gmra.mxu0 %v976
      %v1837 = vpop.f32.mrf.mxu0
      %v1838 = vadd.f32 0.0, %v1837
      %v1839 = vpop.f32.mrf.mxu0
      %v1840 = vadd.f32 0.0, %v1839
      %1841 = vmatmul.bf16.gmra.mxu0 %v978
      %v1842 = vpop.f32.mrf.mxu0
      %v1843 = vadd.f32 0.0, %v1842
      %v1844 = vpop.f32.mrf.mxu0
      %v1845 = vadd.f32 0.0, %v1844
      %1846 = vmatmul.bf16.gmra.mxu0 %v980
      %v1847 = vpop.f32.mrf.mxu0
      %v1848 = vadd.f32 0.0, %v1847
      %v1849 = vpop.f32.mrf.mxu0
      %v1850 = vadd.f32 0.0, %v1849
      %1851 = vmatmul.bf16.gmra.mxu0 %v982
      %v1852 = vpop.f32.mrf.mxu0
      %v1853 = vadd.f32 0.0, %v1852
      %v1854 = vpop.f32.mrf.mxu0
      %v1855 = vadd.f32 0.0, %v1854
      %1856 = vmatmul.bf16.gmra.mxu0 %v984
      %v1857 = vpop.f32.mrf.mxu0
      %v1858 = vadd.f32 0.0, %v1857
      %v1859 = vpop.f32.mrf.mxu0
      %v1860 = vadd.f32 0.0, %v1859
      %1861 = vmatmul.bf16.gmra.mxu0 %v986
      %v1862 = vpop.f32.mrf.mxu0
      %v1863 = vadd.f32 0.0, %v1862
      %v1864 = vpop.f32.mrf.mxu0
      %v1865 = vadd.f32 0.0, %v1864
      %1866 = vmatmul.bf16.gmra.mxu0 %v988
      %v1867 = vpop.f32.mrf.mxu0
      %v1868 = vadd.f32 0.0, %v1867
      %v1869 = vpop.f32.mrf.mxu0
      %v1870 = vadd.f32 0.0, %v1869
      %1871 = vmatmul.bf16.gmra.mxu0 %v990
      %v1872 = vpop.f32.mrf.mxu0
      %v1873 = vadd.f32 0.0, %v1872
      %v1874 = vpop.f32.mrf.mxu0
      %v1875 = vadd.f32 0.0, %v1874
      %1876 = vmatmul.bf16.gmra.mxu0 %v992
      %v1877 = vpop.f32.mrf.mxu0
      %v1878 = vadd.f32 0.0, %v1877
      %v1879 = vpop.f32.mrf.mxu0
      %v1880 = vadd.f32 0.0, %v1879
      %1881 = vmatmul.bf16.gmra.mxu0 %v994
      %v1882 = vpop.f32.mrf.mxu0
      %v1883 = vadd.f32 0.0, %v1882
      %v1884 = vpop.f32.mrf.mxu0
      %v1885 = vadd.f32 0.0, %v1884
      %1886 = vmatmul.bf16.gmra.mxu0 %v1370
      %v1887 = vpop.f32.mrf.mxu0
      %v1888 = vadd.f32 0.0, %v1887
      %v1889 = vpop.f32.mrf.mxu0
      %v1890 = vadd.f32 0.0, %v1889
      %1891 = vmatmul.bf16.gmra.mxu0 %v964
      %v1892 = vpop.f32.mrf.mxu0
      %v1893 = vadd.f32 0.0, %v1892
      %v1894 = vpop.f32.mrf.mxu0
      %v1895 = vadd.f32 0.0, %v1894
      %1896 = vdwg.mxu0
      %v1897 = vadd.f32 %v1759, %v1818
      %v1898 = vadd.f32 %v1760, %v1820
      %v1899 = vadd.f32 %v1761, %v1823
      %v1900 = vadd.f32 %v1762, %v1825
      %v1901 = vadd.f32 %v1763, %v1828
      %v1902 = vadd.f32 %v1764, %v1830
      %v1903 = vadd.f32 %v1765, %v1833
      %v1904 = vadd.f32 %v1766, %v1835
      %v1905 = vadd.f32 %v1767, %v1838
      %v1906 = vadd.f32 %v1768, %v1840
      %v1907 = vadd.f32 %v1769, %v1843
      %v1908 = vadd.f32 %v1770, %v1845
      %v1909 = vadd.f32 %v1771, %v1848
      %v1910 = vadd.f32 %v1772, %v1850
      %v1911 = vadd.f32 %v1773, %v1853
      %v1912 = vadd.f32 %v1774, %v1855
      %v1913 = vadd.f32 %v1775, %v1858
      %v1914 = vadd.f32 %v1776, %v1860
      %v1915 = vadd.f32 %v1777, %v1863
      %v1916 = vadd.f32 %v1778, %v1865
      %v1917 = vadd.f32 %v1779, %v1868
      %v1918 = vadd.f32 %v1780, %v1870
      %v1919 = vadd.f32 %v1781, %v1873
      %v1920 = vadd.f32 %v1782, %v1875
      %v1921 = vadd.f32 %v1783, %v1878
      %v1922 = vadd.f32 %v1784, %v1880
      %v1923 = vadd.f32 %v1785, %v1883
      %v1924 = vadd.f32 %v1786, %v1885
      %v1925 = vadd.f32 %v1787, %v1888
      %v1926 = vadd.f32 %v1788, %v1890
      %v1927 = vadd.f32 %v1789, %v1893
      %v1928 = vadd.f32 %v1790, %v1895
      %s1929 = scalar_lea.vmem %s281, 112
      %v1930 = vld [vmem:[%s1929] sm:$0xf]
      %v1931 = vld [vmem:[%s1929 + $0x4] sm:$0xf]
      %v1932 = vld [vmem:[%s1929 + $0x8] sm:$0xf]
      %v1933 = vld [vmem:[%s1929 + $0xc] sm:$0xf]
      %v1938 = vunpack.c.l.b16 %v1930
      %v1939 = vunpack.c.l.b16 %v1931
      %v1940 = vunpack.c.l.b16 %v1932
      %v1941 = vunpack.c.l.b16 %v1933
      %v1942 = vpack.c.b16 %v1939, %v1938
      %v1943 = vpack.c.b16 %v1941, %v1940
      %1946 = vmatpush.bf16.msra.mxu0 0
      %1947 = vmatpush.bf16.msra.mxu0 0
      %1948 = vmatpush.bf16.msra.mxu0 0
      %1949 = vmatpush.bf16.msra.mxu0 0
      %1950 = vmatpush.bf16.msra.mxu0 0
      %1951 = vmatpush.bf16.msra.mxu0 0
      %1952 = vmatpush.bf16.msra.mxu0 %v1943
      %1953 = vmatpush.bf16.msra.mxu0 %v1942
      %1954 = vmatmul.bf16.gmra.mxu0 %v822
      %v1955 = vpop.f32.mrf.mxu0
      %v1956 = vadd.f32 0.0, %v1955
      %v1957 = vpop.f32.mrf.mxu0
      %v1958 = vadd.f32 0.0, %v1957
      %1959 = vmatmul.bf16.gmra.mxu0 %v825
      %v1960 = vpop.f32.mrf.mxu0
      %v1961 = vadd.f32 0.0, %v1960
      %v1962 = vpop.f32.mrf.mxu0
      %v1963 = vadd.f32 0.0, %v1962
      %1964 = vmatmul.bf16.gmra.mxu0 %v828
      %v1965 = vpop.f32.mrf.mxu0
      %v1966 = vadd.f32 0.0, %v1965
      %v1967 = vpop.f32.mrf.mxu0
      %v1968 = vadd.f32 0.0, %v1967
      %1969 = vmatmul.bf16.gmra.mxu0 %v831
      %v1970 = vpop.f32.mrf.mxu0
      %v1971 = vadd.f32 0.0, %v1970
      %v1972 = vpop.f32.mrf.mxu0
      %v1973 = vadd.f32 0.0, %v1972
      %1974 = vmatmul.bf16.gmra.mxu0 %v834
      %v1975 = vpop.f32.mrf.mxu0
      %v1976 = vadd.f32 0.0, %v1975
      %v1977 = vpop.f32.mrf.mxu0
      %v1978 = vadd.f32 0.0, %v1977
      %1979 = vmatmul.bf16.gmra.mxu0 %v837
      %v1980 = vpop.f32.mrf.mxu0
      %v1981 = vadd.f32 0.0, %v1980
      %v1982 = vpop.f32.mrf.mxu0
      %v1983 = vadd.f32 0.0, %v1982
      %1984 = vmatmul.bf16.gmra.mxu0 %v840
      %v1985 = vpop.f32.mrf.mxu0
      %v1986 = vadd.f32 0.0, %v1985
      %v1987 = vpop.f32.mrf.mxu0
      %v1988 = vadd.f32 0.0, %v1987
      %1989 = vmatmul.bf16.gmra.mxu0 %v843
      %v1990 = vpop.f32.mrf.mxu0
      %v1991 = vadd.f32 0.0, %v1990
      %v1992 = vpop.f32.mrf.mxu0
      %v1993 = vadd.f32 0.0, %v1992
      %1994 = vmatmul.bf16.gmra.mxu0 %v846
      %v1995 = vpop.f32.mrf.mxu0
      %v1996 = vadd.f32 0.0, %v1995
      %v1997 = vpop.f32.mrf.mxu0
      %v1998 = vadd.f32 0.0, %v1997
      %1999 = vmatmul.bf16.gmra.mxu0 %v849
      %v2000 = vpop.f32.mrf.mxu0
      %v2001 = vadd.f32 0.0, %v2000
      %v2002 = vpop.f32.mrf.mxu0
      %v2003 = vadd.f32 0.0, %v2002
      %2004 = vmatmul.bf16.gmra.mxu0 %v852
      %v2005 = vpop.f32.mrf.mxu0
      %v2006 = vadd.f32 0.0, %v2005
      %v2007 = vpop.f32.mrf.mxu0
      %v2008 = vadd.f32 0.0, %v2007
      %2009 = vmatmul.bf16.gmra.mxu0 %v855
      %v2010 = vpop.f32.mrf.mxu0
      %v2011 = vadd.f32 0.0, %v2010
      %v2012 = vpop.f32.mrf.mxu0
      %v2013 = vadd.f32 0.0, %v2012
      %2014 = vmatmul.bf16.gmra.mxu0 %v858
      %v2015 = vpop.f32.mrf.mxu0
      %v2016 = vadd.f32 0.0, %v2015
      %v2017 = vpop.f32.mrf.mxu0
      %v2018 = vadd.f32 0.0, %v2017
      %2019 = vmatmul.bf16.gmra.mxu0 %v861
      %v2020 = vpop.f32.mrf.mxu0
      %v2021 = vadd.f32 0.0, %v2020
      %v2022 = vpop.f32.mrf.mxu0
      %v2023 = vadd.f32 0.0, %v2022
      %2024 = vmatmul.bf16.gmra.mxu0 %v1522
      %v2025 = vpop.f32.mrf.mxu0
      %v2026 = vadd.f32 0.0, %v2025
      %v2027 = vpop.f32.mrf.mxu0
      %v2028 = vadd.f32 0.0, %v2027
      %2029 = vmatmul.bf16.gmra.mxu0 %v816
      %v2030 = vpop.f32.mrf.mxu0
      %v2031 = vadd.f32 0.0, %v2030
      %v2032 = vpop.f32.mrf.mxu0
      %v2033 = vadd.f32 0.0, %v2032
      %2034 = vdwg.mxu0
      %v2035 = vadd.f32 %v1897, %v1956
      %v2036 = vadd.f32 %v1898, %v1958
      %v2037 = vadd.f32 %v1899, %v1961
      %v2038 = vadd.f32 %v1900, %v1963
      %v2039 = vadd.f32 %v1901, %v1966
      %v2040 = vadd.f32 %v1902, %v1968
      %v2041 = vadd.f32 %v1903, %v1971
      %v2042 = vadd.f32 %v1904, %v1973
      %v2043 = vadd.f32 %v1905, %v1976
      %v2044 = vadd.f32 %v1906, %v1978
      %v2045 = vadd.f32 %v1907, %v1981
      %v2046 = vadd.f32 %v1908, %v1983
      %v2047 = vadd.f32 %v1909, %v1986
      %v2048 = vadd.f32 %v1910, %v1988
      %v2049 = vadd.f32 %v1911, %v1991
      %v2050 = vadd.f32 %v1912, %v1993
      %v2051 = vadd.f32 %v1913, %v1996
      %v2052 = vadd.f32 %v1914, %v1998
      %v2053 = vadd.f32 %v1915, %v2001
      %v2054 = vadd.f32 %v1916, %v2003
      %v2055 = vadd.f32 %v1917, %v2006
      %v2056 = vadd.f32 %v1918, %v2008
      %v2057 = vadd.f32 %v1919, %v2011
      %v2058 = vadd.f32 %v1920, %v2013
      %v2059 = vadd.f32 %v1921, %v2016
      %v2060 = vadd.f32 %v1922, %v2018
      %v2061 = vadd.f32 %v1923, %v2021
      %v2062 = vadd.f32 %v1924, %v2023
      %v2063 = vadd.f32 %v1925, %v2026
      %v2064 = vadd.f32 %v1926, %v2028
      %v2065 = vadd.f32 %v1927, %v2031
      %v2066 = vadd.f32 %v1928, %v2033
      %s2067 = scalar_lea.vmem %s281, 128
      %v2068 = vld [vmem:[%s2067] sm:$0xf]
      %v2069 = vld [vmem:[%s2067 + $0x4] sm:$0xf]
      %v2070 = vld [vmem:[%s2067 + $0x8] sm:$0xf]
      %v2071 = vld [vmem:[%s2067 + $0xc] sm:$0xf]
      %v2076 = vunpack.c.l.b16 %v2068
      %v2077 = vunpack.c.l.b16 %v2069
      %v2078 = vunpack.c.l.b16 %v2070
      %v2079 = vunpack.c.l.b16 %v2071
      %v2080 = vpack.c.b16 %v2077, %v2076
      %v2081 = vpack.c.b16 %v2079, %v2078
      %2084 = vmatpush.bf16.msra.mxu0 0
      %2085 = vmatpush.bf16.msra.mxu0 0
      %2086 = vmatpush.bf16.msra.mxu0 0
      %2087 = vmatpush.bf16.msra.mxu0 0
      %2088 = vmatpush.bf16.msra.mxu0 0
      %2089 = vmatpush.bf16.msra.mxu0 0
      %2090 = vmatpush.bf16.msra.mxu0 %v2081
      %2091 = vmatpush.bf16.msra.mxu0 %v2080
      %2092 = vmatmul.bf16.gmra.mxu0 %v1190
      %v2093 = vpop.f32.mrf.mxu0
      %v2094 = vadd.f32 0.0, %v2093
      %v2095 = vpop.f32.mrf.mxu0
      %v2096 = vadd.f32 0.0, %v2095
      %2097 = vmatmul.bf16.gmra.mxu0 %v1193
      %v2098 = vpop.f32.mrf.mxu0
      %v2099 = vadd.f32 0.0, %v2098
      %v2100 = vpop.f32.mrf.mxu0
      %v2101 = vadd.f32 0.0, %v2100
      %2102 = vmatmul.bf16.gmra.mxu0 %v1196
      %v2103 = vpop.f32.mrf.mxu0
      %v2104 = vadd.f32 0.0, %v2103
      %v2105 = vpop.f32.mrf.mxu0
      %v2106 = vadd.f32 0.0, %v2105
      %2107 = vmatmul.bf16.gmra.mxu0 %v1199
      %v2108 = vpop.f32.mrf.mxu0
      %v2109 = vadd.f32 0.0, %v2108
      %v2110 = vpop.f32.mrf.mxu0
      %v2111 = vadd.f32 0.0, %v2110
      %2112 = vmatmul.bf16.gmra.mxu0 %v1202
      %v2113 = vpop.f32.mrf.mxu0
      %v2114 = vadd.f32 0.0, %v2113
      %v2115 = vpop.f32.mrf.mxu0
      %v2116 = vadd.f32 0.0, %v2115
      %2117 = vmatmul.bf16.gmra.mxu0 %v1205
      %v2118 = vpop.f32.mrf.mxu0
      %v2119 = vadd.f32 0.0, %v2118
      %v2120 = vpop.f32.mrf.mxu0
      %v2121 = vadd.f32 0.0, %v2120
      %2122 = vmatmul.bf16.gmra.mxu0 %v1208
      %v2123 = vpop.f32.mrf.mxu0
      %v2124 = vadd.f32 0.0, %v2123
      %v2125 = vpop.f32.mrf.mxu0
      %v2126 = vadd.f32 0.0, %v2125
      %2127 = vmatmul.bf16.gmra.mxu0 %v1211
      %v2128 = vpop.f32.mrf.mxu0
      %v2129 = vadd.f32 0.0, %v2128
      %v2130 = vpop.f32.mrf.mxu0
      %v2131 = vadd.f32 0.0, %v2130
      %2132 = vmatmul.bf16.gmra.mxu0 %v1214
      %v2133 = vpop.f32.mrf.mxu0
      %v2134 = vadd.f32 0.0, %v2133
      %v2135 = vpop.f32.mrf.mxu0
      %v2136 = vadd.f32 0.0, %v2135
      %2137 = vmatmul.bf16.gmra.mxu0 %v1217
      %v2138 = vpop.f32.mrf.mxu0
      %v2139 = vadd.f32 0.0, %v2138
      %v2140 = vpop.f32.mrf.mxu0
      %v2141 = vadd.f32 0.0, %v2140
      %2142 = vmatmul.bf16.gmra.mxu0 %v1220
      %v2143 = vpop.f32.mrf.mxu0
      %v2144 = vadd.f32 0.0, %v2143
      %v2145 = vpop.f32.mrf.mxu0
      %v2146 = vadd.f32 0.0, %v2145
      %2147 = vmatmul.bf16.gmra.mxu0 %v1223
      %v2148 = vpop.f32.mrf.mxu0
      %v2149 = vadd.f32 0.0, %v2148
      %v2150 = vpop.f32.mrf.mxu0
      %v2151 = vadd.f32 0.0, %v2150
      %2152 = vmatmul.bf16.gmra.mxu0 %v1226
      %v2153 = vpop.f32.mrf.mxu0
      %v2154 = vadd.f32 0.0, %v2153
      %v2155 = vpop.f32.mrf.mxu0
      %v2156 = vadd.f32 0.0, %v2155
      %2157 = vmatmul.bf16.gmra.mxu0 %v1229
      %v2158 = vpop.f32.mrf.mxu0
      %v2159 = vadd.f32 0.0, %v2158
      %v2160 = vpop.f32.mrf.mxu0
      %v2161 = vadd.f32 0.0, %v2160
      %2162 = vmatmul.bf16.gmra.mxu0 %v1668
      %v2163 = vpop.f32.mrf.mxu0
      %v2164 = vadd.f32 0.0, %v2163
      %v2165 = vpop.f32.mrf.mxu0
      %v2166 = vadd.f32 0.0, %v2165
      %2167 = vmatmul.bf16.gmra.mxu0 %v1184
      %v2168 = vpop.f32.mrf.mxu0
      %v2169 = vadd.f32 0.0, %v2168
      %v2170 = vpop.f32.mrf.mxu0
      %v2171 = vadd.f32 0.0, %v2170
      %2172 = vdwg.mxu0
      %v2173 = vadd.f32 %v2035, %v2094
      %v2174 = vadd.f32 %v2036, %v2096
      %v2175 = vadd.f32 %v2037, %v2099
      %v2176 = vadd.f32 %v2038, %v2101
      %v2177 = vadd.f32 %v2039, %v2104
      %v2178 = vadd.f32 %v2040, %v2106
      %v2179 = vadd.f32 %v2041, %v2109
      %v2180 = vadd.f32 %v2042, %v2111
      %v2181 = vadd.f32 %v2043, %v2114
      %v2182 = vadd.f32 %v2044, %v2116
      %v2183 = vadd.f32 %v2045, %v2119
      %v2184 = vadd.f32 %v2046, %v2121
      %v2185 = vadd.f32 %v2047, %v2124
      %v2186 = vadd.f32 %v2048, %v2126
      %v2187 = vadd.f32 %v2049, %v2129
      %v2188 = vadd.f32 %v2050, %v2131
      %v2189 = vadd.f32 %v2051, %v2134
      %v2190 = vadd.f32 %v2052, %v2136
      %v2191 = vadd.f32 %v2053, %v2139
      %v2192 = vadd.f32 %v2054, %v2141
      %v2193 = vadd.f32 %v2055, %v2144
      %v2194 = vadd.f32 %v2056, %v2146
      %v2195 = vadd.f32 %v2057, %v2149
      %v2196 = vadd.f32 %v2058, %v2151
      %v2197 = vadd.f32 %v2059, %v2154
      %v2198 = vadd.f32 %v2060, %v2156
      %v2199 = vadd.f32 %v2061, %v2159
      %v2200 = vadd.f32 %v2062, %v2161
      %v2201 = vadd.f32 %v2063, %v2164
      %v2202 = vadd.f32 %v2064, %v2166
      %v2203 = vadd.f32 %v2065, %v2169
      %v2204 = vadd.f32 %v2066, %v2171
      %p2205 = scmp.eq.s32.totalorder %s22, 0
      // Predicated region
      $region37: #{_lambda_.3} parent=35 // pred_check
        %p2206 = pneg %p2205
      $region38: #{_lambda_.3} parent=35 // pred_check_branch
        %2208 = sbr.rel (%p2206) target = $region40
      $region39: #{_lambda_.3} parent=35 // pred_region
        %2209 = vst [vmem:[#allocation2] sm:$0xff] %v2173
        %2210 = vst [vmem:[#allocation2 + $0x8] sm:$0xff] %v2174
        %2211 = vst [vmem:[#allocation2 + $0x10] sm:$0xff] %v2175
        %2212 = vst [vmem:[#allocation2 + $0x18] sm:$0xff] %v2176
        %2213 = vst [vmem:[#allocation2 + $0x20] sm:$0xff] %v2177
        %2214 = vst [vmem:[#allocation2 + $0x28] sm:$0xff] %v2178
        %2215 = vst [vmem:[#allocation2 + $0x30] sm:$0xff] %v2179
        %2216 = vst [vmem:[#allocation2 + $0x38] sm:$0xff] %v2180
        %2217 = vst [vmem:[#allocation2 + $0x40] sm:$0xff] %v2181
        %2218 = vst [vmem:[#allocation2 + $0x48] sm:$0xff] %v2182
        %2219 = vst [vmem:[#allocation2 + $0x50] sm:$0xff] %v2183
        %2220 = vst [vmem:[#allocation2 + $0x58] sm:$0xff] %v2184
        %2221 = vst [vmem:[#allocation2 + $0x60] sm:$0xff] %v2185
        %2222 = vst [vmem:[#allocation2 + $0x68] sm:$0xff] %v2186
        %2223 = vst [vmem:[#allocation2 + $0x70] sm:$0xff] %v2187
        %2224 = vst [vmem:[#allocation2 + $0x78] sm:$0xff] %v2188
        %2225 = vst [vmem:[#allocation2 + $0x80] sm:$0xff] %v2189
        %2226 = vst [vmem:[#allocation2 + $0x88] sm:$0xff] %v2190
        %2227 = vst [vmem:[#allocation2 + $0x90] sm:$0xff] %v2191
        %2228 = vst [vmem:[#allocation2 + $0x98] sm:$0xff] %v2192
        %2229 = vst [vmem:[#allocation2 + $0xa0] sm:$0xff] %v2193
        %2230 = vst [vmem:[#allocation2 + $0xa8] sm:$0xff] %v2194
        %2231 = vst [vmem:[#allocation2 + $0xb0] sm:$0xff] %v2195
        %2232 = vst [vmem:[#allocation2 + $0xb8] sm:$0xff] %v2196
        %2233 = vst [vmem:[#allocation2 + $0xc0] sm:$0xff] %v2197
        %2234 = vst [vmem:[#allocation2 + $0xc8] sm:$0xff] %v2198
        %2235 = vst [vmem:[#allocation2 + $0xd0] sm:$0xff] %v2199
        %2236 = vst [vmem:[#allocation2 + $0xd8] sm:$0xff] %v2200
        %2237 = vst [vmem:[#allocation2 + $0xe0] sm:$0xff] %v2201
        %2238 = vst [vmem:[#allocation2 + $0xe8] sm:$0xff] %v2202
        %2239 = vst [vmem:[#allocation2 + $0xf0] sm:$0xff] %v2203
        %2240 = vst [vmem:[#allocation2 + $0xf8] sm:$0xff] %v2204
      $region40: #{_lambda_.3} parent=35 // pred_fallthru
        _
      %p2241 = scmp.gt.s32.totalorder %s22, 0
      // Predicated region
      $region41: #{_lambda_.3} parent=35 // pred_check
        %p2242 = pneg %p2241
      $region42: #{_lambda_.3} parent=35 // pred_check_branch
        %2244 = sbr.rel (%p2242) target = $region44
      $region43: #{_lambda_.3} parent=35 // pred_region
        %v2245 = vld [vmem:[#allocation2] sm:$0xff]
        %v2246 = vld [vmem:[#allocation2 + $0x8] sm:$0xff]
        %v2247 = vld [vmem:[#allocation2 + $0x10] sm:$0xff]
        %v2248 = vld [vmem:[#allocation2 + $0x18] sm:$0xff]
        %v2249 = vld [vmem:[#allocation2 + $0x20] sm:$0xff]
        %v2250 = vld [vmem:[#allocation2 + $0x28] sm:$0xff]
        %v2251 = vld [vmem:[#allocation2 + $0x30] sm:$0xff]
        %v2252 = vld [vmem:[#allocation2 + $0x38] sm:$0xff]
        %v2253 = vld [vmem:[#allocation2 + $0x40] sm:$0xff]
        %v2254 = vld [vmem:[#allocation2 + $0x48] sm:$0xff]
        %v2255 = vld [vmem:[#allocation2 + $0x50] sm:$0xff]
        %v2256 = vld [vmem:[#allocation2 + $0x58] sm:$0xff]
        %v2257 = vld [vmem:[#allocation2 + $0x60] sm:$0xff]
        %v2258 = vld [vmem:[#allocation2 + $0x68] sm:$0xff]
        %v2259 = vld [vmem:[#allocation2 + $0x70] sm:$0xff]
        %v2260 = vld [vmem:[#allocation2 + $0x78] sm:$0xff]
        %v2261 = vld [vmem:[#allocation2 + $0x80] sm:$0xff]
        %v2262 = vld [vmem:[#allocation2 + $0x88] sm:$0xff]
        %v2263 = vld [vmem:[#allocation2 + $0x90] sm:$0xff]
        %v2264 = vld [vmem:[#allocation2 + $0x98] sm:$0xff]
        %v2265 = vld [vmem:[#allocation2 + $0xa0] sm:$0xff]
        %v2266 = vld [vmem:[#allocation2 + $0xa8] sm:$0xff]
        %v2267 = vld [vmem:[#allocation2 + $0xb0] sm:$0xff]
        %v2268 = vld [vmem:[#allocation2 + $0xb8] sm:$0xff]
        %v2269 = vld [vmem:[#allocation2 + $0xc0] sm:$0xff]
        %v2270 = vld [vmem:[#allocation2 + $0xc8] sm:$0xff]
        %v2271 = vld [vmem:[#allocation2 + $0xd0] sm:$0xff]
        %v2272 = vld [vmem:[#allocation2 + $0xd8] sm:$0xff]
        %v2273 = vld [vmem:[#allocation2 + $0xe0] sm:$0xff]
        %v2274 = vld [vmem:[#allocation2 + $0xe8] sm:$0xff]
        %v2275 = vld [vmem:[#allocation2 + $0xf0] sm:$0xff]
        %v2276 = vld [vmem:[#allocation2 + $0xf8] sm:$0xff]
        %v2277 = vadd.f32 %v2245, %v2173
        %v2278 = vadd.f32 %v2246, %v2174
        %v2279 = vadd.f32 %v2247, %v2175
        %v2280 = vadd.f32 %v2248, %v2176
        %v2281 = vadd.f32 %v2249, %v2177
        %v2282 = vadd.f32 %v2250, %v2178
        %v2283 = vadd.f32 %v2251, %v2179
        %v2284 = vadd.f32 %v2252, %v2180
        %v2285 = vadd.f32 %v2253, %v2181
        %v2286 = vadd.f32 %v2254, %v2182
        %v2287 = vadd.f32 %v2255, %v2183
        %v2288 = vadd.f32 %v2256, %v2184
        %v2289 = vadd.f32 %v2257, %v2185
        %v2290 = vadd.f32 %v2258, %v2186
        %v2291 = vadd.f32 %v2259, %v2187
        %v2292 = vadd.f32 %v2260, %v2188
        %v2293 = vadd.f32 %v2261, %v2189
        %v2294 = vadd.f32 %v2262, %v2190
        %v2295 = vadd.f32 %v2263, %v2191
        %v2296 = vadd.f32 %v2264, %v2192
        %v2297 = vadd.f32 %v2265, %v2193
        %v2298 = vadd.f32 %v2266, %v2194
        %v2299 = vadd.f32 %v2267, %v2195
        %v2300 = vadd.f32 %v2268, %v2196
        %v2301 = vadd.f32 %v2269, %v2197
        %v2302 = vadd.f32 %v2270, %v2198
        %v2303 = vadd.f32 %v2271, %v2199
        %v2304 = vadd.f32 %v2272, %v2200
        %v2305 = vadd.f32 %v2273, %v2201
        %v2306 = vadd.f32 %v2274, %v2202
        %v2307 = vadd.f32 %v2275, %v2203
        %v2308 = vadd.f32 %v2276, %v2204
        %2309 = vst [vmem:[#allocation2] sm:$0xff] %v2277
        %2310 = vst [vmem:[#allocation2 + $0x8] sm:$0xff] %v2278
        %2311 = vst [vmem:[#allocation2 + $0x10] sm:$0xff] %v2279
        %2312 = vst [vmem:[#allocation2 + $0x18] sm:$0xff] %v2280
        %2313 = vst [vmem:[#allocation2 + $0x20] sm:$0xff] %v2281
        %2314 = vst [vmem:[#allocation2 + $0x28] sm:$0xff] %v2282
        %2315 = vst [vmem:[#allocation2 + $0x30] sm:$0xff] %v2283
        %2316 = vst [vmem:[#allocation2 + $0x38] sm:$0xff] %v2284
        %2317 = vst [vmem:[#allocation2 + $0x40] sm:$0xff] %v2285
        %2318 = vst [vmem:[#allocation2 + $0x48] sm:$0xff] %v2286
        %2319 = vst [vmem:[#allocation2 + $0x50] sm:$0xff] %v2287
        %2320 = vst [vmem:[#allocation2 + $0x58] sm:$0xff] %v2288
        %2321 = vst [vmem:[#allocation2 + $0x60] sm:$0xff] %v2289
        %2322 = vst [vmem:[#allocation2 + $0x68] sm:$0xff] %v2290
        %2323 = vst [vmem:[#allocation2 + $0x70] sm:$0xff] %v2291
        %2324 = vst [vmem:[#allocation2 + $0x78] sm:$0xff] %v2292
        %2325 = vst [vmem:[#allocation2 + $0x80] sm:$0xff] %v2293
        %2326 = vst [vmem:[#allocation2 + $0x88] sm:$0xff] %v2294
        %2327 = vst [vmem:[#allocation2 + $0x90] sm:$0xff] %v2295
        %2328 = vst [vmem:[#allocation2 + $0x98] sm:$0xff] %v2296
        %2329 = vst [vmem:[#allocation2 + $0xa0] sm:$0xff] %v2297
        %2330 = vst [vmem:[#allocation2 + $0xa8] sm:$0xff] %v2298
        %2331 = vst [vmem:[#allocation2 + $0xb0] sm:$0xff] %v2299
        %2332 = vst [vmem:[#allocation2 + $0xb8] sm:$0xff] %v2300
        %2333 = vst [vmem:[#allocation2 + $0xc0] sm:$0xff] %v2301
        %2334 = vst [vmem:[#allocation2 + $0xc8] sm:$0xff] %v2302
        %2335 = vst [vmem:[#allocation2 + $0xd0] sm:$0xff] %v2303
        %2336 = vst [vmem:[#allocation2 + $0xd8] sm:$0xff] %v2304
        %2337 = vst [vmem:[#allocation2 + $0xe0] sm:$0xff] %v2305
        %2338 = vst [vmem:[#allocation2 + $0xe8] sm:$0xff] %v2306
        %2339 = vst [vmem:[#allocation2 + $0xf0] sm:$0xff] %v2307
        %2340 = vst [vmem:[#allocation2 + $0xf8] sm:$0xff] %v2308
      $region44: #{_lambda_.3} parent=35 // pred_fallthru
        _
      // Predicated region
      $region45: #{_lambda_.3} parent=35 // pred_check
        %p2341 = pneg %p2205
      $region46: #{_lambda_.3} parent=35 // pred_check_branch
        %2343 = sbr.rel (%p2341) target = $region48
      $region47: #{_lambda_.3} parent=35 // pred_region
        %v2344 = vld [vmem:[#allocation2] sm:$0xff]
        %v2345 = vld [vmem:[#allocation2 + $0x8] sm:$0xff]
        %v2346 = vld [vmem:[#allocation2 + $0x10] sm:$0xff]
        %v2347 = vld [vmem:[#allocation2 + $0x18] sm:$0xff]
        %v2348 = vld [vmem:[#allocation2 + $0x20] sm:$0xff]
        %v2349 = vld [vmem:[#allocation2 + $0x28] sm:$0xff]
        %v2350 = vld [vmem:[#allocation2 + $0x30] sm:$0xff]
        %v2351 = vld [vmem:[#allocation2 + $0x38] sm:$0xff]
        %v2352 = vld [vmem:[#allocation2 + $0x40] sm:$0xff]
        %v2353 = vld [vmem:[#allocation2 + $0x48] sm:$0xff]
        %v2354 = vld [vmem:[#allocation2 + $0x50] sm:$0xff]
        %v2355 = vld [vmem:[#allocation2 + $0x58] sm:$0xff]
        %v2356 = vld [vmem:[#allocation2 + $0x60] sm:$0xff]
        %v2357 = vld [vmem:[#allocation2 + $0x68] sm:$0xff]
        %v2358 = vld [vmem:[#allocation2 + $0x70] sm:$0xff]
        %v2359 = vld [vmem:[#allocation2 + $0x78] sm:$0xff]
        %v2360 = vld [vmem:[#allocation2 + $0x80] sm:$0xff]
        %v2361 = vld [vmem:[#allocation2 + $0x88] sm:$0xff]
        %v2362 = vld [vmem:[#allocation2 + $0x90] sm:$0xff]
        %v2363 = vld [vmem:[#allocation2 + $0x98] sm:$0xff]
        %v2364 = vld [vmem:[#allocation2 + $0xa0] sm:$0xff]
        %v2365 = vld [vmem:[#allocation2 + $0xa8] sm:$0xff]
        %v2366 = vld [vmem:[#allocation2 + $0xb0] sm:$0xff]
        %v2367 = vld [vmem:[#allocation2 + $0xb8] sm:$0xff]
        %v2368 = vld [vmem:[#allocation2 + $0xc0] sm:$0xff]
        %v2369 = vld [vmem:[#allocation2 + $0xc8] sm:$0xff]
        %v2370 = vld [vmem:[#allocation2 + $0xd0] sm:$0xff]
        %v2371 = vld [vmem:[#allocation2 + $0xd8] sm:$0xff]
        %v2372 = vld [vmem:[#allocation2 + $0xe0] sm:$0xff]
        %v2373 = vld [vmem:[#allocation2 + $0xe8] sm:$0xff]
        %v2374 = vld [vmem:[#allocation2 + $0xf0] sm:$0xff]
        %v2375 = vld [vmem:[#allocation2 + $0xf8] sm:$0xff]
        %v2376 = vld [vmem:[%s285] sm:$0x1]
        %v2378 = vperm.slane %v2376, 0
        %v2380 = vmul.f32 %v2344, %v2378
        %v2381 = vmul.f32 %v2345, %v2378
        %v2382 = vmul.f32 %v2346, %v2378
        %v2383 = vmul.f32 %v2347, %v2378
        %v2384 = vmul.f32 %v2348, %v2378
        %v2385 = vmul.f32 %v2349, %v2378
        %v2386 = vmul.f32 %v2350, %v2378
        %v2387 = vmul.f32 %v2351, %v2378
        %v2388 = vmul.f32 %v2352, %v2378
        %v2389 = vmul.f32 %v2353, %v2378
        %v2390 = vmul.f32 %v2354, %v2378
        %v2391 = vmul.f32 %v2355, %v2378
        %v2392 = vmul.f32 %v2356, %v2378
        %v2393 = vmul.f32 %v2357, %v2378
        %v2394 = vmul.f32 %v2358, %v2378
        %v2395 = vmul.f32 %v2359, %v2378
        %v2396 = vmul.f32 %v2360, %v2378
        %v2397 = vmul.f32 %v2361, %v2378
        %v2398 = vmul.f32 %v2362, %v2378
        %v2399 = vmul.f32 %v2363, %v2378
        %v2400 = vmul.f32 %v2364, %v2378
        %v2401 = vmul.f32 %v2365, %v2378
        %v2402 = vmul.f32 %v2366, %v2378
        %v2403 = vmul.f32 %v2367, %v2378
        %v2404 = vmul.f32 %v2368, %v2378
        %v2405 = vmul.f32 %v2369, %v2378
        %v2406 = vmul.f32 %v2370, %v2378
        %v2407 = vmul.f32 %v2371, %v2378
        %v2408 = vmul.f32 %v2372, %v2378
        %v2409 = vmul.f32 %v2373, %v2378
        %v2410 = vmul.f32 %v2374, %v2378
        %v2411 = vmul.f32 %v2375, %v2378
        %v2412 = vld [vmem:[%s288] sm:$0x1]
        %v2414 = vperm.slane %v2412, 0
        %v2416 = vadd.f32 %v2380, %v2414
        %v2417 = vadd.f32 %v2381, %v2414
        %v2418 = vadd.f32 %v2382, %v2414
        %v2419 = vadd.f32 %v2383, %v2414
        %v2420 = vadd.f32 %v2384, %v2414
        %v2421 = vadd.f32 %v2385, %v2414
        %v2422 = vadd.f32 %v2386, %v2414
        %v2423 = vadd.f32 %v2387, %v2414
        %v2424 = vadd.f32 %v2388, %v2414
        %v2425 = vadd.f32 %v2389, %v2414
        %v2426 = vadd.f32 %v2390, %v2414
        %v2427 = vadd.f32 %v2391, %v2414
        %v2428 = vadd.f32 %v2392, %v2414
        %v2429 = vadd.f32 %v2393, %v2414
        %v2430 = vadd.f32 %v2394, %v2414
        %v2431 = vadd.f32 %v2395, %v2414
        %v2432 = vadd.f32 %v2396, %v2414
        %v2433 = vadd.f32 %v2397, %v2414
        %v2434 = vadd.f32 %v2398, %v2414
        %v2435 = vadd.f32 %v2399, %v2414
        %v2436 = vadd.f32 %v2400, %v2414
        %v2437 = vadd.f32 %v2401, %v2414
        %v2438 = vadd.f32 %v2402, %v2414
        %v2439 = vadd.f32 %v2403, %v2414
        %v2440 = vadd.f32 %v2404, %v2414
        %v2441 = vadd.f32 %v2405, %v2414
        %v2442 = vadd.f32 %v2406, %v2414
        %v2443 = vadd.f32 %v2407, %v2414
        %v2444 = vadd.f32 %v2408, %v2414
        %v2445 = vadd.f32 %v2409, %v2414
        %v2446 = vadd.f32 %v2410, %v2414
        %v2447 = vadd.f32 %v2411, %v2414
        %v2448 = vmax.f32 %v2416, 0.0
        %v2449 = vmax.f32 %v2417, 0.0
        %v2450 = vmax.f32 %v2418, 0.0
        %v2451 = vmax.f32 %v2419, 0.0
        %v2452 = vmax.f32 %v2420, 0.0
        %v2453 = vmax.f32 %v2421, 0.0
        %v2454 = vmax.f32 %v2422, 0.0
        %v2455 = vmax.f32 %v2423, 0.0
        %v2456 = vmax.f32 %v2424, 0.0
        %v2457 = vmax.f32 %v2425, 0.0
        %v2458 = vmax.f32 %v2426, 0.0
        %v2459 = vmax.f32 %v2427, 0.0
        %v2460 = vmax.f32 %v2428, 0.0
        %v2461 = vmax.f32 %v2429, 0.0
        %v2462 = vmax.f32 %v2430, 0.0
        %v2463 = vmax.f32 %v2431, 0.0
        %v2464 = vmax.f32 %v2432, 0.0
        %v2465 = vmax.f32 %v2433, 0.0
        %v2466 = vmax.f32 %v2434, 0.0
        %v2467 = vmax.f32 %v2435, 0.0
        %v2468 = vmax.f32 %v2436, 0.0
        %v2469 = vmax.f32 %v2437, 0.0
        %v2470 = vmax.f32 %v2438, 0.0
        %v2471 = vmax.f32 %v2439, 0.0
        %v2472 = vmax.f32 %v2440, 0.0
        %v2473 = vmax.f32 %v2441, 0.0
        %v2474 = vmax.f32 %v2442, 0.0
        %v2475 = vmax.f32 %v2443, 0.0
        %v2476 = vmax.f32 %v2444, 0.0
        %v2477 = vmax.f32 %v2445, 0.0
        %v2478 = vmax.f32 %v2446, 0.0
        %v2479 = vmax.f32 %v2447, 0.0
        %2480 = vst [vmem:[%s296] sm:$0xff] %v2448
        %2481 = vst [vmem:[%s296 + $0x8] sm:$0xff] %v2449
        %2482 = vst [vmem:[%s296 + $0x10] sm:$0xff] %v2450
        %2483 = vst [vmem:[%s296 + $0x18] sm:$0xff] %v2451
        %2484 = vst [vmem:[%s296 + $0x20] sm:$0xff] %v2452
        %2485 = vst [vmem:[%s296 + $0x28] sm:$0xff] %v2453
        %2486 = vst [vmem:[%s296 + $0x30] sm:$0xff] %v2454
        %2487 = vst [vmem:[%s296 + $0x38] sm:$0xff] %v2455
        %2488 = vst [vmem:[%s296 + $0x40] sm:$0xff] %v2456
        %2489 = vst [vmem:[%s296 + $0x48] sm:$0xff] %v2457
        %2490 = vst [vmem:[%s296 + $0x50] sm:$0xff] %v2458
        %2491 = vst [vmem:[%s296 + $0x58] sm:$0xff] %v2459
        %2492 = vst [vmem:[%s296 + $0x60] sm:$0xff] %v2460
        %2493 = vst [vmem:[%s296 + $0x68] sm:$0xff] %v2461
        %2494 = vst [vmem:[%s296 + $0x70] sm:$0xff] %v2462
        %2495 = vst [vmem:[%s296 + $0x78] sm:$0xff] %v2463
        %2496 = vst [vmem:[%s296 + $0x80] sm:$0xff] %v2464
        %2497 = vst [vmem:[%s296 + $0x88] sm:$0xff] %v2465
        %2498 = vst [vmem:[%s296 + $0x90] sm:$0xff] %v2466
        %2499 = vst [vmem:[%s296 + $0x98] sm:$0xff] %v2467
        %2500 = vst [vmem:[%s296 + $0xa0] sm:$0xff] %v2468
        %2501 = vst [vmem:[%s296 + $0xa8] sm:$0xff] %v2469
        %2502 = vst [vmem:[%s296 + $0xb0] sm:$0xff] %v2470
        %2503 = vst [vmem:[%s296 + $0xb8] sm:$0xff] %v2471
        %2504 = vst [vmem:[%s296 + $0xc0] sm:$0xff] %v2472
        %2505 = vst [vmem:[%s296 + $0xc8] sm:$0xff] %v2473
        %2506 = vst [vmem:[%s296 + $0xd0] sm:$0xff] %v2474
        %2507 = vst [vmem:[%s296 + $0xd8] sm:$0xff] %v2475
        %2508 = vst [vmem:[%s296 + $0xe0] sm:$0xff] %v2476
        %2509 = vst [vmem:[%s296 + $0xe8] sm:$0xff] %v2477
        %2510 = vst [vmem:[%s296 + $0xf0] sm:$0xff] %v2478
        %2511 = vst [vmem:[%s296 + $0xf8] sm:$0xff] %v2479
      $region48: #{_lambda_.3} parent=35 // pred_fallthru
        _
      %p2512 = scmp.lt.s32.totalorder %s20, 1
      %s2513 = scalar_select %p2512, %s20, 1
      %p2514 = scmp.lt.s32.totalorder %s21, 0
      %s2515 = scalar_select %p2514, %s21, 0
      %s2516 = smul.addr %s2513, 32
      %s2517 = sadd.s32 %s2515, %s2516
      %s2518 = smul.addr %s2517, 8
      %s2519 = scalar_lea.vmem %s4, %s2518
      // Predicated region
      $region49: #{_lambda_.3} parent=35 // pred_check
        %p2520 = pneg %p162
      $region50: #{_lambda_.3} parent=35 // pred_check_branch
        %2522 = sbr.rel (%p2520) target = $region52
      $region51: #{_lambda_.3} parent=35 // pred_region
        _
      $region52: #{_lambda_.3} parent=35 // pred_fallthru
        _
    $region36: #{_lambda_.3} parent=5 // pred_fallthru
      _
    %p2523 = scmp.le.s32.totalorder 2, %s10
    // Predicated region
    $region53: #{_lambda_.3} parent=5 // pred_check
      %p2524 = pneg %p2523
    $region54: #{_lambda_.3} parent=5 // pred_check_branch
      %2526 = sbr.rel (%p2524) target = $region56
    $region55: #{_lambda_.3} parent=5 // pred_region
      %s2527 = ssub.s32 %s10, 2
      // Predicated region
      $region57: #{_lambda_.3} parent=55 // pred_check
        %p2528 = pneg %p168
      $region58: #{_lambda_.3} parent=55 // pred_check_branch
        %2530 = sbr.rel (%p2528) target = $region60
      $region59: #{_lambda_.3} parent=55 // pred_region
        %p2531 = scmp.lt.s32.totalorder %s23, 1
        %s2532 = scalar_select %p2531, %s23, 1
        %p2533 = scmp.lt.s32.totalorder %s24, 0
        %s2534 = scalar_select %p2533, %s24, 0
        %s2535 = smul.addr %s2532, 32
        %s2536 = sadd.s32 %s2534, %s2535
        %s2537 = smul.addr %s2536, 8
        %s2538 = scalar_lea.vmem %s4, %s2537
      $region60: #{_lambda_.3} parent=55 // pred_fallthru
        _
    $region56: #{_lambda_.3} parent=5 // pred_fallthru
      _
  $region6: #{_lambda_.3} parent=0 // loop_footer
    %s14 = sadd.s32 1, %s10
  $region7: #{_lambda_.3} parent=0 // loop_footer_branch
    %9 = sbr.rel target = $region3
  $region8: #{_lambda_.3} parent=0 // loop_exit
    _

</llo_original>
